<compile_context>
chip_gen: v7x
topology: tpu7x:2x2x1
jax: 0.10.0
libtpu: 0.0.40
codegen_flags: <defaults>
</compile_context>

<pallas_src>
import functools
import math

import jax
import jax.numpy as jnp
import numpy as np
from jax.experimental import pallas as pl
from jax.experimental.pallas import tpu as pltpu


# ----------------------------------------------------------------------------
# Static (trace-time) bilinear interpolation helpers (align_corners=False).
# ----------------------------------------------------------------------------
def _bilinear_1d_weights(out_size, in_size):
    """Python-level 2-tap gather indices/weights, matching F.interpolate."""
    scale = in_size / out_size
    i0s, i1s, w0s, w1s = [], [], [], []
    for d in range(out_size):
        src = max((d + 0.5) * scale - 0.5, 0.0)
        i0 = min(int(math.floor(src)), in_size - 1)
        i1 = min(i0 + 1, in_size - 1)
        t = src - i0
        i0s.append(i0)
        i1s.append(i1)
        w0s.append(1.0 - t)
        w1s.append(t)
    return i0s, i1s, w0s, w1s


def _bilinear_matrix(out_size, in_size):
    """Dense (out, in) 1-D interpolation matrix, f32 (used for the W stage)."""
    i0s, i1s, w0s, w1s = _bilinear_1d_weights(out_size, in_size)
    m = np.zeros((out_size, in_size), np.float32)
    for d in range(out_size):
        m[d, i0s[d]] += w0s[d]
        m[d, i1s[d]] += w1s[d]
    return jnp.asarray(m)


# ----------------------------------------------------------------------------
# Pallas kernel: one grid step per batch element; fully fused forward pass.
# ----------------------------------------------------------------------------
def _lraspp_kernel(high_ref, low_ref, w1_ref, bnsc_ref, bnbi_ref, whe_ref,
                   wlow_ref, bsum_ref, mw_ref, out_ref,
                   *, Wh, Wl, h_i0, h_i1, h_w0, h_w1):
    f32 = jnp.float32

    # ---- cbr: 1x1 conv (bias-free, bf16 MXU) -> folded BatchNorm -> ReLU ----
    h = high_ref[...]                                           # (HWh, Ch) bf16
    x = jnp.dot(h, w1_ref[...], preferred_element_type=f32)     # (HWh, Ci) f32
    x = jnp.maximum(x * bnsc_ref[...] + bnbi_ref[...], 0.0)

    # ---- high classifier folded BEFORE the upsample --------------------------
    # whe already contains the sigmoid scale s (folded in the wrapper), so
    # y[p, :] is the per-pixel high-classifier contribution at high resolution.
    y = jnp.dot(x, whe_ref[...], preferred_element_type=f32)    # (HWh, Kp) f32

    # ---- low classifier + summed bias, one big lane-dense (Kp=128) matmul ----
    low = low_ref[...]                                          # (HWl, Cl) bf16
    base = jnp.dot(low, wlow_ref[...], preferred_element_type=f32) + bsum_ref[...]
    out_ref[...] = base.astype(out_ref.dtype)                   # (HWl, Kp)

    # ---- separable bilinear upsample of y, accumulated into the output -------
    # H direction: static 2-tap lerp (VPU); W direction: (Wl, Wh) MXU matmul.
    mw = mw_ref[...]                                            # (Wl, Wh) f32
    for l in range(len(h_i0)):                                  # static unroll over Hl
        r0, r1 = h_i0[l], h_i1[l]
        yh = (h_w0[l] * y[r0 * Wh:(r0 + 1) * Wh, :]
              + h_w1[l] * y[r1 * Wh:(r1 + 1) * Wh, :])          # (Wh, Kp)
        up = jnp.dot(mw, yh, preferred_element_type=f32)        # (Wl, Kp)
        rows = slice(l * Wl, (l + 1) * Wl)
        out_ref[rows, :] = (out_ref[rows, :] + up).astype(out_ref.dtype)


# ----------------------------------------------------------------------------
# Wrapper: layout plumbing, scale-branch hoist, K padding, bf16 casts.
# ----------------------------------------------------------------------------
def lraspp_head_pallas(low_nchw, high_nchw, params):
    """low: (N, Cl, Hl, Wl), high: (N, Ch, Hh, Wh) -> (N, K, Hl, Wl) f32."""
    N, Cl, Hl, Wl = low_nchw.shape
    _, Ch, Hh, Wh = high_nchw.shape
    Ci = params["w1"].shape[1]
    K = params["w_low"].shape[1]
    Kp = max(128, ((K + 127) // 128) * 128)          # lane-dense padded class dim

    # NCHW -> (N, H*W, C): channels on the lane axis.
    low_flat = jnp.transpose(low_nchw, (0, 2, 3, 1)).reshape(N, Hl * Wl, Cl)
    high_flat = jnp.transpose(high_nchw, (0, 2, 3, 1)).reshape(N, Hh * Wh, Ch)

    # Scale branch (AdaptiveAvgPool2d(1) -> 1x1 conv -> Sigmoid), hoisted here
    # and folded into the high-classifier weight (exact algebra).
    mean = jnp.mean(high_nchw, axis=(2, 3))                         # (N, Ch)
    s = jax.nn.sigmoid(jnp.einsum("nc,ci->ni", mean, params["w2"],
                                  precision=jax.lax.Precision.HIGHEST))

    pad_k = lambda a: jnp.pad(a, ((0, 0), (0, Kp - K)))
    w_high_p = pad_k(params["w_high"])                              # (Ci, Kp) f32
    w_he = s[:, :, None] * w_high_p[None, :, :]                     # (N, Ci, Kp) f32
    w_low_p = pad_k(params["w_low"]).astype(jnp.bfloat16)           # (Cl, Kp)
    b_sum = pad_k(params["b_low"] + params["b_high"])               # (1, Kp) f32

    # Big operands in bf16 (bf16 x bf16 products are exact; accumulate in f32).
    high_bf = high_flat.astype(jnp.bfloat16)
    low_bf = low_flat.astype(jnp.bfloat16)
    w1_bf = params["w1"].astype(jnp.bfloat16)

    # Separable upsample factors: W stage as a small matrix, H stage as static taps.
    mw = _bilinear_matrix(Wl, Wh)                                   # (Wl, Wh) f32
    h_i0, h_i1, h_w0, h_w1 = _bilinear_1d_weights(Hl, Hh)           # static python

    kernel = functools.partial(
        _lraspp_kernel, Wh=Wh, Wl=Wl,
        h_i0=tuple(h_i0), h_i1=tuple(h_i1),
        h_w0=tuple(h_w0), h_w1=tuple(h_w1))

    # TODO(synk): for N=1 inference add a second "parallel" grid axis over
    # output-row tiles so both v7x TensorCores are used.
    out_flat = pl.pallas_call(
        kernel,
        out_shape=jax.ShapeDtypeStruct((N, Hl * Wl, Kp), jnp.float32),
        grid=(N,),
        in_specs=[
            pl.BlockSpec((None, Hh * Wh, Ch), lambda b: (b, 0, 0)),   # high
            pl.BlockSpec((None, Hl * Wl, Cl), lambda b: (b, 0, 0)),   # low
            pl.BlockSpec((Ch, Ci), lambda b: (0, 0)),                 # w1 (bf16)
            pl.BlockSpec((1, Ci), lambda b: (0, 0)),                  # bn scale
            pl.BlockSpec((1, Ci), lambda b: (0, 0)),                  # bn bias
            pl.BlockSpec((None, Ci, Kp), lambda b: (b, 0, 0)),        # w_high (s folded)
            pl.BlockSpec((Cl, Kp), lambda b: (0, 0)),                 # w_low (bf16)
            pl.BlockSpec((1, Kp), lambda b: (0, 0)),                  # b_low + b_high
            pl.BlockSpec((Wl, Wh), lambda b: (0, 0)),                 # W-stage interp
        ],
        out_specs=pl.BlockSpec((None, Hl * Wl, Kp), lambda b: (b, 0, 0)),
        compiler_params=pltpu.CompilerParams(
            dimension_semantics=("parallel",)),
    )(high_bf, low_bf, w1_bf, params["bn_scale"], params["bn_bias"],
      w_he, w_low_p, b_sum, mw)

    out = out_flat[:, :, :K].reshape(N, Hl, Wl, K)      # drop class padding
    return jnp.transpose(out, (0, 3, 1, 2))             # back to NCHW


# ----------------------------------------------------------------------------
# Pure-JAX reference (module math, no algebraic refactoring) for the check.
# It mirrors the kernel's bf16 rounding of the large matmul operands.
# ----------------------------------------------------------------------------
def lraspp_ref(low_nchw, high_nchw, params, num_classes):
    N, Cl, Hl, Wl = low_nchw.shape
    _, Ch, Hh, Wh = high_nchw.shape
    hp = jax.lax.Precision.HIGHEST

    low_flat = jnp.transpose(low_nchw, (0, 2, 3, 1)).reshape(N, Hl * Wl, Cl)
    high_flat = jnp.transpose(high_nchw, (0, 2, 3, 1)).reshape(N, Hh * Wh, Ch)

    rq = lambda a: a.astype(jnp.bfloat16).astype(jnp.float32)
    high_q, low_q = rq(high_flat), rq(low_flat)
    w1_q, w_low_q = rq(params["w1"]), rq(params["w_low"])

    x = jnp.einsum("npc,ci->npi", high_q, w1_q, precision=hp)
    x = jnp.maximum(x * params["bn_scale"] + params["bn_bias"], 0.0)
    mean = jnp.mean(high_nchw, axis=(2, 3))
    s = jax.nn.sigmoid(jnp.einsum("nc,ci->ni", mean, params["w2"], precision=hp))
    x = x * s[:, None, :]

    interp_m = jnp.kron(_bilinear_matrix(Hl, Hh), _bilinear_matrix(Wl, Wh))
    x_up = jnp.einsum("qp,npi->nqi", interp_m, x, precision=hp)

    out = (jnp.einsum("npc,ck->npk", low_q, w_low_q, precision=hp)
           + params["b_low"]
           + jnp.einsum("npi,ik->npk", x_up, params["w_high"], precision=hp)
           + params["b_high"])
    out = out.reshape(N, Hl, Wl, num_classes)
    return jnp.transpose(out, (0, 3, 1, 2))


if __name__ == "__main__":
    # Small shapes consistent with the module (high branch is lower resolution).
    N = 2
    low_channels, high_channels = 4, 8
    inter_channels, num_classes = 16, 3
    Hl = Wl = 16
    Hh = Wh = 8

    key = jax.random.PRNGKey(0)
    ks = jax.random.split(key, 12)

    low_nchw = jax.random.normal(ks[0], (N, low_channels, Hl, Wl), jnp.float32)
    high_nchw = jax.random.normal(ks[1], (N, high_channels, Hh, Wh), jnp.float32)

    # Deterministic synthetic parameters (shapes from the module __init__).
    w1 = 0.2 * jax.random.normal(ks[2], (high_channels, inter_channels), jnp.float32)
    gamma = 1.0 + 0.1 * jax.random.normal(ks[3], (inter_channels,), jnp.float32)
    beta = 0.1 * jax.random.normal(ks[4], (inter_channels,), jnp.float32)
    run_mean = 0.1 * jax.random.normal(ks[5], (inter_channels,), jnp.float32)
    run_var = jax.random.uniform(ks[6], (inter_channels,), jnp.float32, 0.5, 1.5)
    eps = 1e-5
    bn_scale = (gamma / jnp.sqrt(run_var + eps))[None, :]          # (1, Ci)
    bn_bias = (beta - run_mean * bn_scale[0])[None, :]             # (1, Ci)
    w2 = 0.2 * jax.random.normal(ks[7], (high_channels, inter_channels), jnp.float32)
    w_low = 0.2 * jax.random.normal(ks[8], (low_channels, num_classes), jnp.float32)
    b_low = 0.1 * jax.random.normal(ks[9], (1, num_classes), jnp.float32)
    w_high = 0.2 * jax.random.normal(ks[10], (inter_channels, num_classes), jnp.float32)
    b_high = 0.1 * jax.random.normal(ks[11], (1, num_classes), jnp.float32)

    params = dict(w1=w1, bn_scale=bn_scale, bn_bias=bn_bias, w2=w2,
                  w_low=w_low, b_low=b_low, w_high=w_high, b_high=b_high)

    out = lraspp_head_pallas(low_nchw, high_nchw, params)
    out = jax.block_until_ready(out)

    ref = lraspp_ref(low_nchw, high_nchw, params, num_classes)
    assert out.shape == (N, num_classes, Hl, Wl)
    assert jnp.allclose(out, ref, atol=1e-3, rtol=1e-3), "mismatch vs JAX reference"

    print("KERNEL_OK")
</pallas_src>

<mosaic_0001>
module attributes {stable_mosaic.version = 11 : i64} {
  func.func @_lraspp_kernel(%arg0: i32, %arg1: memref<1x64x8xbf16, #tpu.memory_space<vmem>>, %arg2: memref<1x256x4xbf16, #tpu.memory_space<vmem>>, %arg3: memref<8x16xbf16, #tpu.memory_space<vmem>>, %arg4: memref<1x16xf32, #tpu.memory_space<vmem>>, %arg5: memref<1x16xf32, #tpu.memory_space<vmem>>, %arg6: memref<1x16x128xf32, #tpu.memory_space<vmem>>, %arg7: memref<4x128xbf16, #tpu.memory_space<vmem>>, %arg8: memref<1x128xf32, #tpu.memory_space<vmem>>, %arg9: memref<16x8xf32, #tpu.memory_space<vmem>>, %arg10: memref<1x256x128xf32, #tpu.memory_space<vmem>>) attributes {dimension_semantics = [#tpu.dimension_semantics<parallel>], iteration_bounds = array<i64: 2>, scalar_prefetch = 0 : i64, scratch_operands = 0 : i64, tpu.core_type = #tpu.core_type<tc>, window_params = [{transform_indices = @transform_0, window_bounds = array<i64: 1, 64, 8>}, {transform_indices = @transform_1, window_bounds = array<i64: 1, 256, 4>}, {pipeline_mode = #tpu.pipeline_mode<synchronous>, transform_indices = @transform_2, window_bounds = array<i64: 8, 16>}, {pipeline_mode = #tpu.pipeline_mode<synchronous>, transform_indices = @transform_3, window_bounds = array<i64: 1, 16>}, {pipeline_mode = #tpu.pipeline_mode<synchronous>, transform_indices = @transform_4, window_bounds = array<i64: 1, 16>}, {transform_indices = @transform_5, window_bounds = array<i64: 1, 16, 128>}, {pipeline_mode = #tpu.pipeline_mode<synchronous>, transform_indices = @transform_6, window_bounds = array<i64: 4, 128>}, {pipeline_mode = #tpu.pipeline_mode<synchronous>, transform_indices = @transform_7, window_bounds = array<i64: 1, 128>}, {pipeline_mode = #tpu.pipeline_mode<synchronous>, transform_indices = @transform_8, window_bounds = array<i64: 16, 8>}, {transform_indices = @transform_9, window_bounds = array<i64: 1, 256, 128>}]} {
    %c0 = arith.constant 0 : index
    %c0_0 = arith.constant 0 : index
    %c0_1 = arith.constant 0 : index
    %0 = vector.load %arg1[%c0, %c0_0, %c0_1] : memref<1x64x8xbf16, #tpu.memory_space<vmem>>, vector<1x64x8xbf16>
    %1 = vector.shape_cast %0 : vector<1x64x8xbf16> to vector<64x8xbf16>
    %c0_2 = arith.constant 0 : index
    %c0_3 = arith.constant 0 : index
    %2 = vector.load %arg3[%c0_2, %c0_3] : memref<8x16xbf16, #tpu.memory_space<vmem>>, vector<8x16xbf16>
    %cst = arith.constant dense<0.000000e+00> : vector<64x16xf32>
    %3 = tpu.matmul %1, %2, %cst {dimension_numbers = #tpu.dot_dimension_numbers<[1], [0], [0], [1], [0, 0, 1, 1], [], []>} : vector<64x8xbf16>, vector<8x16xbf16>, vector<64x16xf32> -> vector<64x16xf32>
    %c0_4 = arith.constant 0 : index
    %c0_5 = arith.constant 0 : index
    %4 = vector.load %arg4[%c0_4, %c0_5] : memref<1x16xf32, #tpu.memory_space<vmem>>, vector<1x16xf32>
    %5 = vector.broadcast %4 : vector<1x16xf32> to vector<64x16xf32>
    %6 = arith.mulf %3, %5 : vector<64x16xf32>
    %c0_6 = arith.constant 0 : index
    %c0_7 = arith.constant 0 : index
    %7 = vector.load %arg5[%c0_6, %c0_7] : memref<1x16xf32, #tpu.memory_space<vmem>>, vector<1x16xf32>
    %8 = vector.broadcast %7 : vector<1x16xf32> to vector<64x16xf32>
    %9 = arith.addf %6, %8 : vector<64x16xf32>
    %cst_8 = arith.constant 0.000000e+00 : f32
    %10 = vector.broadcast %cst_8 : f32 to vector<64x16xf32>
    %11 = arith.maximumf %9, %10 : vector<64x16xf32>
    %c0_9 = arith.constant 0 : index
    %c0_10 = arith.constant 0 : index
    %c0_11 = arith.constant 0 : index
    %12 = vector.load %arg6[%c0_9, %c0_10, %c0_11] : memref<1x16x128xf32, #tpu.memory_space<vmem>>, vector<1x16x128xf32>
    %13 = vector.shape_cast %12 : vector<1x16x128xf32> to vector<16x128xf32>
    %cst_12 = arith.constant dense<0.000000e+00> : vector<64x128xf32>
    %14 = tpu.matmul %11, %13, %cst_12 {dimension_numbers = #tpu.dot_dimension_numbers<[1], [0], [0], [1], [0, 0, 1, 1], [], []>} : vector<64x16xf32>, vector<16x128xf32>, vector<64x128xf32> -> vector<64x128xf32>
    %c0_13 = arith.constant 0 : index
    %c0_14 = arith.constant 0 : index
    %c0_15 = arith.constant 0 : index
    %15 = vector.load %arg2[%c0_13, %c0_14, %c0_15] : memref<1x256x4xbf16, #tpu.memory_space<vmem>>, vector<1x256x4xbf16>
    %16 = vector.shape_cast %15 : vector<1x256x4xbf16> to vector<256x4xbf16>
    %c0_16 = arith.constant 0 : index
    %c0_17 = arith.constant 0 : index
    %17 = vector.load %arg7[%c0_16, %c0_17] : memref<4x128xbf16, #tpu.memory_space<vmem>>, vector<4x128xbf16>
    %cst_18 = arith.constant dense<0.000000e+00> : vector<256x128xf32>
    %18 = tpu.matmul %16, %17, %cst_18 {dimension_numbers = #tpu.dot_dimension_numbers<[1], [0], [0], [1], [0, 0, 1, 1], [], []>} : vector<256x4xbf16>, vector<4x128xbf16>, vector<256x128xf32> -> vector<256x128xf32>
    %c0_19 = arith.constant 0 : index
    %c0_20 = arith.constant 0 : index
    %19 = vector.load %arg8[%c0_19, %c0_20] : memref<1x128xf32, #tpu.memory_space<vmem>>, vector<1x128xf32>
    %20 = vector.broadcast %19 : vector<1x128xf32> to vector<256x128xf32>
    %21 = arith.addf %18, %20 : vector<256x128xf32>
    %c0_21 = arith.constant 0 : index
    %c0_22 = arith.constant 0 : index
    %c0_23 = arith.constant 0 : index
    %22 = vector.load %arg10[%c0_21, %c0_22, %c0_23] : memref<1x256x128xf32, #tpu.memory_space<vmem>>, vector<1x256x128xf32>
    %23 = vector.shape_cast %22 : vector<1x256x128xf32> to vector<256x128xf32>
    %24 = vector.shape_cast %21 : vector<256x128xf32> to vector<1x256x128xf32>
    tpu.vector_store %arg10[%c0_21, %c0_22, %c0_23], %24 {strides = array<i32>} : memref<1x256x128xf32, #tpu.memory_space<vmem>>, vector<1x256x128xf32>,
    %c0_24 = arith.constant 0 : index
    %c0_25 = arith.constant 0 : index
    %25 = vector.load %arg9[%c0_24, %c0_25] : memref<16x8xf32, #tpu.memory_space<vmem>>, vector<16x8xf32>
    %26 = vector.extract_strided_slice %14 {offsets = [0, 0], sizes = [8, 128], strides = [1, 1]} : vector<64x128xf32> to vector<8x128xf32>
    %cst_26 = arith.constant 1.000000e+00 : f32
    %27 = vector.broadcast %cst_26 : f32 to vector<8x128xf32>
    %28 = arith.mulf %27, %26 : vector<8x128xf32>
    %29 = vector.extract_strided_slice %14 {offsets = [8, 0], sizes = [8, 128], strides = [1, 1]} : vector<64x128xf32> to vector<8x128xf32>
    %cst_27 = arith.constant 0.000000e+00 : f32
    %30 = vector.broadcast %cst_27 : f32 to vector<8x128xf32>
    %31 = arith.mulf %30, %29 : vector<8x128xf32>
    %32 = arith.addf %28, %31 : vector<8x128xf32>
    %cst_28 = arith.constant dense<0.000000e+00> : vector<16x128xf32>
    %33 = tpu.matmul %25, %32, %cst_28 {dimension_numbers = #tpu.dot_dimension_numbers<[1], [0], [0], [1], [0, 0, 1, 1], [], []>} : vector<16x8xf32>, vector<8x128xf32>, vector<16x128xf32> -> vector<16x128xf32>
    %c0_29 = arith.constant 0 : index
    %c0_30 = arith.constant 0 : index
    %c0_31 = arith.constant 0 : index
    %34 = vector.load %arg10[%c0_29, %c0_30, %c0_31] : memref<1x256x128xf32, #tpu.memory_space<vmem>>, vector<1x16x128xf32>
    %35 = vector.shape_cast %34 : vector<1x16x128xf32> to vector<16x128xf32>
    %36 = arith.addf %35, %33 : vector<16x128xf32>
    %c0_32 = arith.constant 0 : index
    %c0_33 = arith.constant 0 : index
    %c0_34 = arith.constant 0 : index
    %37 = vector.load %arg10[%c0_32, %c0_33, %c0_34] : memref<1x256x128xf32, #tpu.memory_space<vmem>>, vector<1x16x128xf32>
    %38 = vector.shape_cast %37 : vector<1x16x128xf32> to vector<16x128xf32>
    %39 = vector.shape_cast %36 : vector<16x128xf32> to vector<1x16x128xf32>
    tpu.vector_store %arg10[%c0_32, %c0_33, %c0_34], %39 {strides = array<i32>} : memref<1x256x128xf32, #tpu.memory_space<vmem>>, vector<1x16x128xf32>,
    %40 = vector.extract_strided_slice %14 {offsets = [0, 0], sizes = [8, 128], strides = [1, 1]} : vector<64x128xf32> to vector<8x128xf32>
    %cst_35 = arith.constant 7.500000e-01 : f32
    %41 = vector.broadcast %cst_35 : f32 to vector<8x128xf32>
    %42 = arith.mulf %41, %40 : vector<8x128xf32>
    %43 = vector.extract_strided_slice %14 {offsets = [8, 0], sizes = [8, 128], strides = [1, 1]} : vector<64x128xf32> to vector<8x128xf32>
    %cst_36 = arith.constant 2.500000e-01 : f32
    %44 = vector.broadcast %cst_36 : f32 to vector<8x128xf32>
    %45 = arith.mulf %44, %43 : vector<8x128xf32>
    %46 = arith.addf %42, %45 : vector<8x128xf32>
    %cst_37 = arith.constant dense<0.000000e+00> : vector<16x128xf32>
    %47 = tpu.matmul %25, %46, %cst_37 {dimension_numbers = #tpu.dot_dimension_numbers<[1], [0], [0], [1], [0, 0, 1, 1], [], []>} : vector<16x8xf32>, vector<8x128xf32>, vector<16x128xf32> -> vector<16x128xf32>
    %c0_38 = arith.constant 0 : index
    %c16 = arith.constant 16 : index
    %c0_39 = arith.constant 0 : index
    %48 = vector.load %arg10[%c0_38, %c16, %c0_39] : memref<1x256x128xf32, #tpu.memory_space<vmem>>, vector<1x16x128xf32>
    %49 = vector.shape_cast %48 : vector<1x16x128xf32> to vector<16x128xf32>
    %50 = arith.addf %49, %47 : vector<16x128xf32>
    %c0_40 = arith.constant 0 : index
    %c16_41 = arith.constant 16 : index
    %c0_42 = arith.constant 0 : index
    %51 = vector.load %arg10[%c0_40, %c16_41, %c0_42] : memref<1x256x128xf32, #tpu.memory_space<vmem>>, vector<1x16x128xf32>
    %52 = vector.shape_cast %51 : vector<1x16x128xf32> to vector<16x128xf32>
    %53 = vector.shape_cast %50 : vector<16x128xf32> to vector<1x16x128xf32>
    tpu.vector_store %arg10[%c0_40, %c16_41, %c0_42], %53 {strides = array<i32>} : memref<1x256x128xf32, #tpu.memory_space<vmem>>, vector<1x16x128xf32>,
    %54 = vector.extract_strided_slice %14 {offsets = [0, 0], sizes = [8, 128], strides = [1, 1]} : vector<64x128xf32> to vector<8x128xf32>
    %cst_43 = arith.constant 2.500000e-01 : f32
    %55 = vector.broadcast %cst_43 : f32 to vector<8x128xf32>
    %56 = arith.mulf %55, %54 : vector<8x128xf32>
    %57 = vector.extract_strided_slice %14 {offsets = [8, 0], sizes = [8, 128], strides = [1, 1]} : vector<64x128xf32> to vector<8x128xf32>
    %cst_44 = arith.constant 7.500000e-01 : f32
    %58 = vector.broadcast %cst_44 : f32 to vector<8x128xf32>
    %59 = arith.mulf %58, %57 : vector<8x128xf32>
    %60 = arith.addf %56, %59 : vector<8x128xf32>
    %cst_45 = arith.constant dense<0.000000e+00> : vector<16x128xf32>
    %61 = tpu.matmul %25, %60, %cst_45 {dimension_numbers = #tpu.dot_dimension_numbers<[1], [0], [0], [1], [0, 0, 1, 1], [], []>} : vector<16x8xf32>, vector<8x128xf32>, vector<16x128xf32> -> vector<16x128xf32>
    %c0_46 = arith.constant 0 : index
    %c32 = arith.constant 32 : index
    %c0_47 = arith.constant 0 : index
    %62 = vector.load %arg10[%c0_46, %c32, %c0_47] : memref<1x256x128xf32, #tpu.memory_space<vmem>>, vector<1x16x128xf32>
    %63 = vector.shape_cast %62 : vector<1x16x128xf32> to vector<16x128xf32>
    %64 = arith.addf %63, %61 : vector<16x128xf32>
    %c0_48 = arith.constant 0 : index
    %c32_49 = arith.constant 32 : index
    %c0_50 = arith.constant 0 : index
    %65 = vector.load %arg10[%c0_48, %c32_49, %c0_50] : memref<1x256x128xf32, #tpu.memory_space<vmem>>, vector<1x16x128xf32>
    %66 = vector.shape_cast %65 : vector<1x16x128xf32> to vector<16x128xf32>
    %67 = vector.shape_cast %64 : vector<16x128xf32> to vector<1x16x128xf32>
    tpu.vector_store %arg10[%c0_48, %c32_49, %c0_50], %67 {strides = array<i32>} : memref<1x256x128xf32, #tpu.memory_space<vmem>>, vector<1x16x128xf32>,
    %68 = vector.extract_strided_slice %14 {offsets = [8, 0], sizes = [8, 128], strides = [1, 1]} : vector<64x128xf32> to vector<8x128xf32>
    %cst_51 = arith.constant 7.500000e-01 : f32
    %69 = vector.broadcast %cst_51 : f32 to vector<8x128xf32>
    %70 = arith.mulf %69, %68 : vector<8x128xf32>
    %71 = vector.extract_strided_slice %14 {offsets = [16, 0], sizes = [8, 128], strides = [1, 1]} : vector<64x128xf32> to vector<8x128xf32>
    %cst_52 = arith.constant 2.500000e-01 : f32
    %72 = vector.broadcast %cst_52 : f32 to vector<8x128xf32>
    %73 = arith.mulf %72, %71 : vector<8x128xf32>
    %74 = arith.addf %70, %73 : vector<8x128xf32>
    %cst_53 = arith.constant dense<0.000000e+00> : vector<16x128xf32>
    %75 = tpu.matmul %25, %74, %cst_53 {dimension_numbers = #tpu.dot_dimension_numbers<[1], [0], [0], [1], [0, 0, 1, 1], [], []>} : vector<16x8xf32>, vector<8x128xf32>, vector<16x128xf32> -> vector<16x128xf32>
    %c0_54 = arith.constant 0 : index
    %c48 = arith.constant 48 : index
    %c0_55 = arith.constant 0 : index
    %76 = vector.load %arg10[%c0_54, %c48, %c0_55] : memref<1x256x128xf32, #tpu.memory_space<vmem>>, vector<1x16x128xf32>
    %77 = vector.shape_cast %76 : vector<1x16x128xf32> to vector<16x128xf32>
    %78 = arith.addf %77, %75 : vector<16x128xf32>
    %c0_56 = arith.constant 0 : index
    %c48_57 = arith.constant 48 : index
    %c0_58 = arith.constant 0 : index
    %79 = vector.load %arg10[%c0_56, %c48_57, %c0_58] : memref<1x256x128xf32, #tpu.memory_space<vmem>>, vector<1x16x128xf32>
    %80 = vector.shape_cast %79 : vector<1x16x128xf32> to vector<16x128xf32>
    %81 = vector.shape_cast %78 : vector<16x128xf32> to vector<1x16x128xf32>
    tpu.vector_store %arg10[%c0_56, %c48_57, %c0_58], %81 {strides = array<i32>} : memref<1x256x128xf32, #tpu.memory_space<vmem>>, vector<1x16x128xf32>,
    %82 = vector.extract_strided_slice %14 {offsets = [8, 0], sizes = [8, 128], strides = [1, 1]} : vector<64x128xf32> to vector<8x128xf32>
    %cst_59 = arith.constant 2.500000e-01 : f32
    %83 = vector.broadcast %cst_59 : f32 to vector<8x128xf32>
    %84 = arith.mulf %83, %82 : vector<8x128xf32>
    %85 = vector.extract_strided_slice %14 {offsets = [16, 0], sizes = [8, 128], strides = [1, 1]} : vector<64x128xf32> to vector<8x128xf32>
    %cst_60 = arith.constant 7.500000e-01 : f32
    %86 = vector.broadcast %cst_60 : f32 to vector<8x128xf32>
    %87 = arith.mulf %86, %85 : vector<8x128xf32>
    %88 = arith.addf %84, %87 : vector<8x128xf32>
    %cst_61 = arith.constant dense<0.000000e+00> : vector<16x128xf32>
    %89 = tpu.matmul %25, %88, %cst_61 {dimension_numbers = #tpu.dot_dimension_numbers<[1], [0], [0], [1], [0, 0, 1, 1], [], []>} : vector<16x8xf32>, vector<8x128xf32>, vector<16x128xf32> -> vector<16x128xf32>
    %c0_62 = arith.constant 0 : index
    %c64 = arith.constant 64 : index
    %c0_63 = arith.constant 0 : index
    %90 = vector.load %arg10[%c0_62, %c64, %c0_63] : memref<1x256x128xf32, #tpu.memory_space<vmem>>, vector<1x16x128xf32>
    %91 = vector.shape_cast %90 : vector<1x16x128xf32> to vector<16x128xf32>
    %92 = arith.addf %91, %89 : vector<16x128xf32>
    %c0_64 = arith.constant 0 : index
    %c64_65 = arith.constant 64 : index
    %c0_66 = arith.constant 0 : index
    %93 = vector.load %arg10[%c0_64, %c64_65, %c0_66] : memref<1x256x128xf32, #tpu.memory_space<vmem>>, vector<1x16x128xf32>
    %94 = vector.shape_cast %93 : vector<1x16x128xf32> to vector<16x128xf32>
    %95 = vector.shape_cast %92 : vector<16x128xf32> to vector<1x16x128xf32>
    tpu.vector_store %arg10[%c0_64, %c64_65, %c0_66], %95 {strides = array<i32>} : memref<1x256x128xf32, #tpu.memory_space<vmem>>, vector<1x16x128xf32>,
    %96 = vector.extract_strided_slice %14 {offsets = [16, 0], sizes = [8, 128], strides = [1, 1]} : vector<64x128xf32> to vector<8x128xf32>
    %cst_67 = arith.constant 7.500000e-01 : f32
    %97 = vector.broadcast %cst_67 : f32 to vector<8x128xf32>
    %98 = arith.mulf %97, %96 : vector<8x128xf32>
    %99 = vector.extract_strided_slice %14 {offsets = [24, 0], sizes = [8, 128], strides = [1, 1]} : vector<64x128xf32> to vector<8x128xf32>
    %cst_68 = arith.constant 2.500000e-01 : f32
    %100 = vector.broadcast %cst_68 : f32 to vector<8x128xf32>
    %101 = arith.mulf %100, %99 : vector<8x128xf32>
    %102 = arith.addf %98, %101 : vector<8x128xf32>
    %cst_69 = arith.constant dense<0.000000e+00> : vector<16x128xf32>
    %103 = tpu.matmul %25, %102, %cst_69 {dimension_numbers = #tpu.dot_dimension_numbers<[1], [0], [0], [1], [0, 0, 1, 1], [], []>} : vector<16x8xf32>, vector<8x128xf32>, vector<16x128xf32> -> vector<16x128xf32>
    %c0_70 = arith.constant 0 : index
    %c80 = arith.constant 80 : index
    %c0_71 = arith.constant 0 : index
    %104 = vector.load %arg10[%c0_70, %c80, %c0_71] : memref<1x256x128xf32, #tpu.memory_space<vmem>>, vector<1x16x128xf32>
    %105 = vector.shape_cast %104 : vector<1x16x128xf32> to vector<16x128xf32>
    %106 = arith.addf %105, %103 : vector<16x128xf32>
    %c0_72 = arith.constant 0 : index
    %c80_73 = arith.constant 80 : index
    %c0_74 = arith.constant 0 : index
    %107 = vector.load %arg10[%c0_72, %c80_73, %c0_74] : memref<1x256x128xf32, #tpu.memory_space<vmem>>, vector<1x16x128xf32>
    %108 = vector.shape_cast %107 : vector<1x16x128xf32> to vector<16x128xf32>
    %109 = vector.shape_cast %106 : vector<16x128xf32> to vector<1x16x128xf32>
    tpu.vector_store %arg10[%c0_72, %c80_73, %c0_74], %109 {strides = array<i32>} : memref<1x256x128xf32, #tpu.memory_space<vmem>>, vector<1x16x128xf32>,
    %110 = vector.extract_strided_slice %14 {offsets = [16, 0], sizes = [8, 128], strides = [1, 1]} : vector<64x128xf32> to vector<8x128xf32>
    %cst_75 = arith.constant 2.500000e-01 : f32
    %111 = vector.broadcast %cst_75 : f32 to vector<8x128xf32>
    %112 = arith.mulf %111, %110 : vector<8x128xf32>
    %113 = vector.extract_strided_slice %14 {offsets = [24, 0], sizes = [8, 128], strides = [1, 1]} : vector<64x128xf32> to vector<8x128xf32>
    %cst_76 = arith.constant 7.500000e-01 : f32
    %114 = vector.broadcast %cst_76 : f32 to vector<8x128xf32>
    %115 = arith.mulf %114, %113 : vector<8x128xf32>
    %116 = arith.addf %112, %115 : vector<8x128xf32>
    %cst_77 = arith.constant dense<0.000000e+00> : vector<16x128xf32>
    %117 = tpu.matmul %25, %116, %cst_77 {dimension_numbers = #tpu.dot_dimension_numbers<[1], [0], [0], [1], [0, 0, 1, 1], [], []>} : vector<16x8xf32>, vector<8x128xf32>, vector<16x128xf32> -> vector<16x128xf32>
    %c0_78 = arith.constant 0 : index
    %c96 = arith.constant 96 : index
    %c0_79 = arith.constant 0 : index
    %118 = vector.load %arg10[%c0_78, %c96, %c0_79] : memref<1x256x128xf32, #tpu.memory_space<vmem>>, vector<1x16x128xf32>
    %119 = vector.shape_cast %118 : vector<1x16x128xf32> to vector<16x128xf32>
    %120 = arith.addf %119, %117 : vector<16x128xf32>
    %c0_80 = arith.constant 0 : index
    %c96_81 = arith.constant 96 : index
    %c0_82 = arith.constant 0 : index
    %121 = vector.load %arg10[%c0_80, %c96_81, %c0_82] : memref<1x256x128xf32, #tpu.memory_space<vmem>>, vector<1x16x128xf32>
    %122 = vector.shape_cast %121 : vector<1x16x128xf32> to vector<16x128xf32>
    %123 = vector.shape_cast %120 : vector<16x128xf32> to vector<1x16x128xf32>
    tpu.vector_store %arg10[%c0_80, %c96_81, %c0_82], %123 {strides = array<i32>} : memref<1x256x128xf32, #tpu.memory_space<vmem>>, vector<1x16x128xf32>,
    %124 = vector.extract_strided_slice %14 {offsets = [24, 0], sizes = [8, 128], strides = [1, 1]} : vector<64x128xf32> to vector<8x128xf32>
    %cst_83 = arith.constant 7.500000e-01 : f32
    %125 = vector.broadcast %cst_83 : f32 to vector<8x128xf32>
    %126 = arith.mulf %125, %124 : vector<8x128xf32>
    %127 = vector.extract_strided_slice %14 {offsets = [32, 0], sizes = [8, 128], strides = [1, 1]} : vector<64x128xf32> to vector<8x128xf32>
    %cst_84 = arith.constant 2.500000e-01 : f32
    %128 = vector.broadcast %cst_84 : f32 to vector<8x128xf32>
    %129 = arith.mulf %128, %127 : vector<8x128xf32>
    %130 = arith.addf %126, %129 : vector<8x128xf32>
    %cst_85 = arith.constant dense<0.000000e+00> : vector<16x128xf32>
    %131 = tpu.matmul %25, %130, %cst_85 {dimension_numbers = #tpu.dot_dimension_numbers<[1], [0], [0], [1], [0, 0, 1, 1], [], []>} : vector<16x8xf32>, vector<8x128xf32>, vector<16x128xf32> -> vector<16x128xf32>
    %c0_86 = arith.constant 0 : index
    %c112 = arith.constant 112 : index
    %c0_87 = arith.constant 0 : index
    %132 = vector.load %arg10[%c0_86, %c112, %c0_87] : memref<1x256x128xf32, #tpu.memory_space<vmem>>, vector<1x16x128xf32>
    %133 = vector.shape_cast %132 : vector<1x16x128xf32> to vector<16x128xf32>
    %134 = arith.addf %133, %131 : vector<16x128xf32>
    %c0_88 = arith.constant 0 : index
    %c112_89 = arith.constant 112 : index
    %c0_90 = arith.constant 0 : index
    %135 = vector.load %arg10[%c0_88, %c112_89, %c0_90] : memref<1x256x128xf32, #tpu.memory_space<vmem>>, vector<1x16x128xf32>
    %136 = vector.shape_cast %135 : vector<1x16x128xf32> to vector<16x128xf32>
    %137 = vector.shape_cast %134 : vector<16x128xf32> to vector<1x16x128xf32>
    tpu.vector_store %arg10[%c0_88, %c112_89, %c0_90], %137 {strides = array<i32>} : memref<1x256x128xf32, #tpu.memory_space<vmem>>, vector<1x16x128xf32>,
    %138 = vector.extract_strided_slice %14 {offsets = [24, 0], sizes = [8, 128], strides = [1, 1]} : vector<64x128xf32> to vector<8x128xf32>
    %cst_91 = arith.constant 2.500000e-01 : f32
    %139 = vector.broadcast %cst_91 : f32 to vector<8x128xf32>
    %140 = arith.mulf %139, %138 : vector<8x128xf32>
    %141 = vector.extract_strided_slice %14 {offsets = [32, 0], sizes = [8, 128], strides = [1, 1]} : vector<64x128xf32> to vector<8x128xf32>
    %cst_92 = arith.constant 7.500000e-01 : f32
    %142 = vector.broadcast %cst_92 : f32 to vector<8x128xf32>
    %143 = arith.mulf %142, %141 : vector<8x128xf32>
    %144 = arith.addf %140, %143 : vector<8x128xf32>
    %cst_93 = arith.constant dense<0.000000e+00> : vector<16x128xf32>
    %145 = tpu.matmul %25, %144, %cst_93 {dimension_numbers = #tpu.dot_dimension_numbers<[1], [0], [0], [1], [0, 0, 1, 1], [], []>} : vector<16x8xf32>, vector<8x128xf32>, vector<16x128xf32> -> vector<16x128xf32>
    %c0_94 = arith.constant 0 : index
    %c128 = arith.constant 128 : index
    %c0_95 = arith.constant 0 : index
    %146 = vector.load %arg10[%c0_94, %c128, %c0_95] : memref<1x256x128xf32, #tpu.memory_space<vmem>>, vector<1x16x128xf32>
    %147 = vector.shape_cast %146 : vector<1x16x128xf32> to vector<16x128xf32>
    %148 = arith.addf %147, %145 : vector<16x128xf32>
    %c0_96 = arith.constant 0 : index
    %c128_97 = arith.constant 128 : index
    %c0_98 = arith.constant 0 : index
    %149 = vector.load %arg10[%c0_96, %c128_97, %c0_98] : memref<1x256x128xf32, #tpu.memory_space<vmem>>, vector<1x16x128xf32>
    %150 = vector.shape_cast %149 : vector<1x16x128xf32> to vector<16x128xf32>
    %151 = vector.shape_cast %148 : vector<16x128xf32> to vector<1x16x128xf32>
    tpu.vector_store %arg10[%c0_96, %c128_97, %c0_98], %151 {strides = array<i32>} : memref<1x256x128xf32, #tpu.memory_space<vmem>>, vector<1x16x128xf32>,
    %152 = vector.extract_strided_slice %14 {offsets = [32, 0], sizes = [8, 128], strides = [1, 1]} : vector<64x128xf32> to vector<8x128xf32>
    %cst_99 = arith.constant 7.500000e-01 : f32
    %153 = vector.broadcast %cst_99 : f32 to vector<8x128xf32>
    %154 = arith.mulf %153, %152 : vector<8x128xf32>
    %155 = vector.extract_strided_slice %14 {offsets = [40, 0], sizes = [8, 128], strides = [1, 1]} : vector<64x128xf32> to vector<8x128xf32>
    %cst_100 = arith.constant 2.500000e-01 : f32
    %156 = vector.broadcast %cst_100 : f32 to vector<8x128xf32>
    %157 = arith.mulf %156, %155 : vector<8x128xf32>
    %158 = arith.addf %154, %157 : vector<8x128xf32>
    %cst_101 = arith.constant dense<0.000000e+00> : vector<16x128xf32>
    %159 = tpu.matmul %25, %158, %cst_101 {dimension_numbers = #tpu.dot_dimension_numbers<[1], [0], [0], [1], [0, 0, 1, 1], [], []>} : vector<16x8xf32>, vector<8x128xf32>, vector<16x128xf32> -> vector<16x128xf32>
    %c0_102 = arith.constant 0 : index
    %c144 = arith.constant 144 : index
    %c0_103 = arith.constant 0 : index
    %160 = vector.load %arg10[%c0_102, %c144, %c0_103] : memref<1x256x128xf32, #tpu.memory_space<vmem>>, vector<1x16x128xf32>
    %161 = vector.shape_cast %160 : vector<1x16x128xf32> to vector<16x128xf32>
    %162 = arith.addf %161, %159 : vector<16x128xf32>
    %c0_104 = arith.constant 0 : index
    %c144_105 = arith.constant 144 : index
    %c0_106 = arith.constant 0 : index
    %163 = vector.load %arg10[%c0_104, %c144_105, %c0_106] : memref<1x256x128xf32, #tpu.memory_space<vmem>>, vector<1x16x128xf32>
    %164 = vector.shape_cast %163 : vector<1x16x128xf32> to vector<16x128xf32>
    %165 = vector.shape_cast %162 : vector<16x128xf32> to vector<1x16x128xf32>
    tpu.vector_store %arg10[%c0_104, %c144_105, %c0_106], %165 {strides = array<i32>} : memref<1x256x128xf32, #tpu.memory_space<vmem>>, vector<1x16x128xf32>,
    %166 = vector.extract_strided_slice %14 {offsets = [32, 0], sizes = [8, 128], strides = [1, 1]} : vector<64x128xf32> to vector<8x128xf32>
    %cst_107 = arith.constant 2.500000e-01 : f32
    %167 = vector.broadcast %cst_107 : f32 to vector<8x128xf32>
    %168 = arith.mulf %167, %166 : vector<8x128xf32>
    %169 = vector.extract_strided_slice %14 {offsets = [40, 0], sizes = [8, 128], strides = [1, 1]} : vector<64x128xf32> to vector<8x128xf32>
    %cst_108 = arith.constant 7.500000e-01 : f32
    %170 = vector.broadcast %cst_108 : f32 to vector<8x128xf32>
    %171 = arith.mulf %170, %169 : vector<8x128xf32>
    %172 = arith.addf %168, %171 : vector<8x128xf32>
    %cst_109 = arith.constant dense<0.000000e+00> : vector<16x128xf32>
    %173 = tpu.matmul %25, %172, %cst_109 {dimension_numbers = #tpu.dot_dimension_numbers<[1], [0], [0], [1], [0, 0, 1, 1], [], []>} : vector<16x8xf32>, vector<8x128xf32>, vector<16x128xf32> -> vector<16x128xf32>
    %c0_110 = arith.constant 0 : index
    %c160 = arith.constant 160 : index
    %c0_111 = arith.constant 0 : index
    %174 = vector.load %arg10[%c0_110, %c160, %c0_111] : memref<1x256x128xf32, #tpu.memory_space<vmem>>, vector<1x16x128xf32>
    %175 = vector.shape_cast %174 : vector<1x16x128xf32> to vector<16x128xf32>
    %176 = arith.addf %175, %173 : vector<16x128xf32>
    %c0_112 = arith.constant 0 : index
    %c160_113 = arith.constant 160 : index
    %c0_114 = arith.constant 0 : index
    %177 = vector.load %arg10[%c0_112, %c160_113, %c0_114] : memref<1x256x128xf32, #tpu.memory_space<vmem>>, vector<1x16x128xf32>
    %178 = vector.shape_cast %177 : vector<1x16x128xf32> to vector<16x128xf32>
    %179 = vector.shape_cast %176 : vector<16x128xf32> to vector<1x16x128xf32>
    tpu.vector_store %arg10[%c0_112, %c160_113, %c0_114], %179 {strides = array<i32>} : memref<1x256x128xf32, #tpu.memory_space<vmem>>, vector<1x16x128xf32>,
    %180 = vector.extract_strided_slice %14 {offsets = [40, 0], sizes = [8, 128], strides = [1, 1]} : vector<64x128xf32> to vector<8x128xf32>
    %cst_115 = arith.constant 7.500000e-01 : f32
    %181 = vector.broadcast %cst_115 : f32 to vector<8x128xf32>
    %182 = arith.mulf %181, %180 : vector<8x128xf32>
    %183 = vector.extract_strided_slice %14 {offsets = [48, 0], sizes = [8, 128], strides = [1, 1]} : vector<64x128xf32> to vector<8x128xf32>
    %cst_116 = arith.constant 2.500000e-01 : f32
    %184 = vector.broadcast %cst_116 : f32 to vector<8x128xf32>
    %185 = arith.mulf %184, %183 : vector<8x128xf32>
    %186 = arith.addf %182, %185 : vector<8x128xf32>
    %cst_117 = arith.constant dense<0.000000e+00> : vector<16x128xf32>
    %187 = tpu.matmul %25, %186, %cst_117 {dimension_numbers = #tpu.dot_dimension_numbers<[1], [0], [0], [1], [0, 0, 1, 1], [], []>} : vector<16x8xf32>, vector<8x128xf32>, vector<16x128xf32> -> vector<16x128xf32>
    %c0_118 = arith.constant 0 : index
    %c176 = arith.constant 176 : index
    %c0_119 = arith.constant 0 : index
    %188 = vector.load %arg10[%c0_118, %c176, %c0_119] : memref<1x256x128xf32, #tpu.memory_space<vmem>>, vector<1x16x128xf32>
    %189 = vector.shape_cast %188 : vector<1x16x128xf32> to vector<16x128xf32>
    %190 = arith.addf %189, %187 : vector<16x128xf32>
    %c0_120 = arith.constant 0 : index
    %c176_121 = arith.constant 176 : index
    %c0_122 = arith.constant 0 : index
    %191 = vector.load %arg10[%c0_120, %c176_121, %c0_122] : memref<1x256x128xf32, #tpu.memory_space<vmem>>, vector<1x16x128xf32>
    %192 = vector.shape_cast %191 : vector<1x16x128xf32> to vector<16x128xf32>
    %193 = vector.shape_cast %190 : vector<16x128xf32> to vector<1x16x128xf32>
    tpu.vector_store %arg10[%c0_120, %c176_121, %c0_122], %193 {strides = array<i32>} : memref<1x256x128xf32, #tpu.memory_space<vmem>>, vector<1x16x128xf32>,
    %194 = vector.extract_strided_slice %14 {offsets = [40, 0], sizes = [8, 128], strides = [1, 1]} : vector<64x128xf32> to vector<8x128xf32>
    %cst_123 = arith.constant 2.500000e-01 : f32
    %195 = vector.broadcast %cst_123 : f32 to vector<8x128xf32>
    %196 = arith.mulf %195, %194 : vector<8x128xf32>
    %197 = vector.extract_strided_slice %14 {offsets = [48, 0], sizes = [8, 128], strides = [1, 1]} : vector<64x128xf32> to vector<8x128xf32>
    %cst_124 = arith.constant 7.500000e-01 : f32
    %198 = vector.broadcast %cst_124 : f32 to vector<8x128xf32>
    %199 = arith.mulf %198, %197 : vector<8x128xf32>
    %200 = arith.addf %196, %199 : vector<8x128xf32>
    %cst_125 = arith.constant dense<0.000000e+00> : vector<16x128xf32>
    %201 = tpu.matmul %25, %200, %cst_125 {dimension_numbers = #tpu.dot_dimension_numbers<[1], [0], [0], [1], [0, 0, 1, 1], [], []>} : vector<16x8xf32>, vector<8x128xf32>, vector<16x128xf32> -> vector<16x128xf32>
    %c0_126 = arith.constant 0 : index
    %c192 = arith.constant 192 : index
    %c0_127 = arith.constant 0 : index
    %202 = vector.load %arg10[%c0_126, %c192, %c0_127] : memref<1x256x128xf32, #tpu.memory_space<vmem>>, vector<1x16x128xf32>
    %203 = vector.shape_cast %202 : vector<1x16x128xf32> to vector<16x128xf32>
    %204 = arith.addf %203, %201 : vector<16x128xf32>
    %c0_128 = arith.constant 0 : index
    %c192_129 = arith.constant 192 : index
    %c0_130 = arith.constant 0 : index
    %205 = vector.load %arg10[%c0_128, %c192_129, %c0_130] : memref<1x256x128xf32, #tpu.memory_space<vmem>>, vector<1x16x128xf32>
    %206 = vector.shape_cast %205 : vector<1x16x128xf32> to vector<16x128xf32>
    %207 = vector.shape_cast %204 : vector<16x128xf32> to vector<1x16x128xf32>
    tpu.vector_store %arg10[%c0_128, %c192_129, %c0_130], %207 {strides = array<i32>} : memref<1x256x128xf32, #tpu.memory_space<vmem>>, vector<1x16x128xf32>,
    %208 = vector.extract_strided_slice %14 {offsets = [48, 0], sizes = [8, 128], strides = [1, 1]} : vector<64x128xf32> to vector<8x128xf32>
    %cst_131 = arith.constant 7.500000e-01 : f32
    %209 = vector.broadcast %cst_131 : f32 to vector<8x128xf32>
    %210 = arith.mulf %209, %208 : vector<8x128xf32>
    %211 = vector.extract_strided_slice %14 {offsets = [56, 0], sizes = [8, 128], strides = [1, 1]} : vector<64x128xf32> to vector<8x128xf32>
    %cst_132 = arith.constant 2.500000e-01 : f32
    %212 = vector.broadcast %cst_132 : f32 to vector<8x128xf32>
    %213 = arith.mulf %212, %211 : vector<8x128xf32>
    %214 = arith.addf %210, %213 : vector<8x128xf32>
    %cst_133 = arith.constant dense<0.000000e+00> : vector<16x128xf32>
    %215 = tpu.matmul %25, %214, %cst_133 {dimension_numbers = #tpu.dot_dimension_numbers<[1], [0], [0], [1], [0, 0, 1, 1], [], []>} : vector<16x8xf32>, vector<8x128xf32>, vector<16x128xf32> -> vector<16x128xf32>
    %c0_134 = arith.constant 0 : index
    %c208 = arith.constant 208 : index
    %c0_135 = arith.constant 0 : index
    %216 = vector.load %arg10[%c0_134, %c208, %c0_135] : memref<1x256x128xf32, #tpu.memory_space<vmem>>, vector<1x16x128xf32>
    %217 = vector.shape_cast %216 : vector<1x16x128xf32> to vector<16x128xf32>
    %218 = arith.addf %217, %215 : vector<16x128xf32>
    %c0_136 = arith.constant 0 : index
    %c208_137 = arith.constant 208 : index
    %c0_138 = arith.constant 0 : index
    %219 = vector.load %arg10[%c0_136, %c208_137, %c0_138] : memref<1x256x128xf32, #tpu.memory_space<vmem>>, vector<1x16x128xf32>
    %220 = vector.shape_cast %219 : vector<1x16x128xf32> to vector<16x128xf32>
    %221 = vector.shape_cast %218 : vector<16x128xf32> to vector<1x16x128xf32>
    tpu.vector_store %arg10[%c0_136, %c208_137, %c0_138], %221 {strides = array<i32>} : memref<1x256x128xf32, #tpu.memory_space<vmem>>, vector<1x16x128xf32>,
    %222 = vector.extract_strided_slice %14 {offsets = [48, 0], sizes = [8, 128], strides = [1, 1]} : vector<64x128xf32> to vector<8x128xf32>
    %cst_139 = arith.constant 2.500000e-01 : f32
    %223 = vector.broadcast %cst_139 : f32 to vector<8x128xf32>
    %224 = arith.mulf %223, %222 : vector<8x128xf32>
    %225 = vector.extract_strided_slice %14 {offsets = [56, 0], sizes = [8, 128], strides = [1, 1]} : vector<64x128xf32> to vector<8x128xf32>
    %cst_140 = arith.constant 7.500000e-01 : f32
    %226 = vector.broadcast %cst_140 : f32 to vector<8x128xf32>
    %227 = arith.mulf %226, %225 : vector<8x128xf32>
    %228 = arith.addf %224, %227 : vector<8x128xf32>
    %cst_141 = arith.constant dense<0.000000e+00> : vector<16x128xf32>
    %229 = tpu.matmul %25, %228, %cst_141 {dimension_numbers = #tpu.dot_dimension_numbers<[1], [0], [0], [1], [0, 0, 1, 1], [], []>} : vector<16x8xf32>, vector<8x128xf32>, vector<16x128xf32> -> vector<16x128xf32>
    %c0_142 = arith.constant 0 : index
    %c224 = arith.constant 224 : index
    %c0_143 = arith.constant 0 : index
    %230 = vector.load %arg10[%c0_142, %c224, %c0_143] : memref<1x256x128xf32, #tpu.memory_space<vmem>>, vector<1x16x128xf32>
    %231 = vector.shape_cast %230 : vector<1x16x128xf32> to vector<16x128xf32>
    %232 = arith.addf %231, %229 : vector<16x128xf32>
    %c0_144 = arith.constant 0 : index
    %c224_145 = arith.constant 224 : index
    %c0_146 = arith.constant 0 : index
    %233 = vector.load %arg10[%c0_144, %c224_145, %c0_146] : memref<1x256x128xf32, #tpu.memory_space<vmem>>, vector<1x16x128xf32>
    %234 = vector.shape_cast %233 : vector<1x16x128xf32> to vector<16x128xf32>
    %235 = vector.shape_cast %232 : vector<16x128xf32> to vector<1x16x128xf32>
    tpu.vector_store %arg10[%c0_144, %c224_145, %c0_146], %235 {strides = array<i32>} : memref<1x256x128xf32, #tpu.memory_space<vmem>>, vector<1x16x128xf32>,
    %236 = vector.extract_strided_slice %14 {offsets = [56, 0], sizes = [8, 128], strides = [1, 1]} : vector<64x128xf32> to vector<8x128xf32>
    %cst_147 = arith.constant 7.500000e-01 : f32
    %237 = vector.broadcast %cst_147 : f32 to vector<8x128xf32>
    %238 = arith.mulf %237, %236 : vector<8x128xf32>
    %239 = vector.extract_strided_slice %14 {offsets = [56, 0], sizes = [8, 128], strides = [1, 1]} : vector<64x128xf32> to vector<8x128xf32>
    %cst_148 = arith.constant 2.500000e-01 : f32
    %240 = vector.broadcast %cst_148 : f32 to vector<8x128xf32>
    %241 = arith.mulf %240, %239 : vector<8x128xf32>
    %242 = arith.addf %238, %241 : vector<8x128xf32>
    %cst_149 = arith.constant dense<0.000000e+00> : vector<16x128xf32>
    %243 = tpu.matmul %25, %242, %cst_149 {dimension_numbers = #tpu.dot_dimension_numbers<[1], [0], [0], [1], [0, 0, 1, 1], [], []>} : vector<16x8xf32>, vector<8x128xf32>, vector<16x128xf32> -> vector<16x128xf32>
    %c0_150 = arith.constant 0 : index
    %c240 = arith.constant 240 : index
    %c0_151 = arith.constant 0 : index
    %244 = vector.load %arg10[%c0_150, %c240, %c0_151] : memref<1x256x128xf32, #tpu.memory_space<vmem>>, vector<1x16x128xf32>
    %245 = vector.shape_cast %244 : vector<1x16x128xf32> to vector<16x128xf32>
    %246 = arith.addf %245, %243 : vector<16x128xf32>
    %c0_152 = arith.constant 0 : index
    %c240_153 = arith.constant 240 : index
    %c0_154 = arith.constant 0 : index
    %247 = vector.load %arg10[%c0_152, %c240_153, %c0_154] : memref<1x256x128xf32, #tpu.memory_space<vmem>>, vector<1x16x128xf32>
    %248 = vector.shape_cast %247 : vector<1x16x128xf32> to vector<16x128xf32>
    %249 = vector.shape_cast %246 : vector<16x128xf32> to vector<1x16x128xf32>
    tpu.vector_store %arg10[%c0_152, %c240_153, %c0_154], %249 {strides = array<i32>} : memref<1x256x128xf32, #tpu.memory_space<vmem>>, vector<1x16x128xf32>,
    return
  }
  func.func @transform_0(%arg0: i32) -> (i32, i32, i32) {
    %c0_i32 = arith.constant 0 : i32
    %c0_i32_0 = arith.constant 0 : i32
    %c0_i32_1 = arith.constant 0 : i32
    return %arg0, %c0_i32, %c0_i32_0 : i32, i32, i32
  }
  func.func @transform_1(%arg0: i32) -> (i32, i32, i32) {
    %c0_i32 = arith.constant 0 : i32
    %c0_i32_0 = arith.constant 0 : i32
    %c0_i32_1 = arith.constant 0 : i32
    return %arg0, %c0_i32, %c0_i32_0 : i32, i32, i32
  }
  func.func @transform_2(%arg0: i32) -> (i32, i32) {
    %c0_i32 = arith.constant 0 : i32
    %c0_i32_0 = arith.constant 0 : i32
    %c0_i32_1 = arith.constant 0 : i32
    return %c0_i32, %c0_i32_0 : i32, i32
  }
  func.func @transform_3(%arg0: i32) -> (i32, i32) {
    %c0_i32 = arith.constant 0 : i32
    %c0_i32_0 = arith.constant 0 : i32
    %c0_i32_1 = arith.constant 0 : i32
    return %c0_i32, %c0_i32_0 : i32, i32
  }
  func.func @transform_4(%arg0: i32) -> (i32, i32) {
    %c0_i32 = arith.constant 0 : i32
    %c0_i32_0 = arith.constant 0 : i32
    %c0_i32_1 = arith.constant 0 : i32
    return %c0_i32, %c0_i32_0 : i32, i32
  }
  func.func @transform_5(%arg0: i32) -> (i32, i32, i32) {
    %c0_i32 = arith.constant 0 : i32
    %c0_i32_0 = arith.constant 0 : i32
    %c0_i32_1 = arith.constant 0 : i32
    return %arg0, %c0_i32, %c0_i32_0 : i32, i32, i32
  }
  func.func @transform_6(%arg0: i32) -> (i32, i32) {
    %c0_i32 = arith.constant 0 : i32
    %c0_i32_0 = arith.constant 0 : i32
    %c0_i32_1 = arith.constant 0 : i32
    return %c0_i32, %c0_i32_0 : i32, i32
  }
  func.func @transform_7(%arg0: i32) -> (i32, i32) {
    %c0_i32 = arith.constant 0 : i32
    %c0_i32_0 = arith.constant 0 : i32
    %c0_i32_1 = arith.constant 0 : i32
    return %c0_i32, %c0_i32_0 : i32, i32
  }
  func.func @transform_8(%arg0: i32) -> (i32, i32) {
    %c0_i32 = arith.constant 0 : i32
    %c0_i32_0 = arith.constant 0 : i32
    %c0_i32_1 = arith.constant 0 : i32
    return %c0_i32, %c0_i32_0 : i32, i32
  }
  func.func @transform_9(%arg0: i32) -> (i32, i32, i32) {
    %c0_i32 = arith.constant 0 : i32
    %c0_i32_0 = arith.constant 0 : i32
    %c0_i32_1 = arith.constant 0 : i32
    return %arg0, %c0_i32, %c0_i32_0 : i32, i32, i32
  }
}

</mosaic_0001>

<llo_original>
// kernel: tpu_custom_call.1
$region0: #{tpu_custom_call.1}
  #allocation0 [shape = 'u32[]', space=smem, size = 0x4, offset = 0x4, fixed_abs, tag = 'smem constant byte address 0x4 - core index']
  #allocation1 [shape = 'u32[144,128]{1,0:T(1,128)}', space=vmem, size = 0x12000, scoped, tag = 'internal scratch']
  %s0 = inlined_call_operand.vmem [shape: bf16[2,64,8], index: 0, kind: input, shape index: {}]
  %s1 = inlined_call_operand.vmem [shape: bf16[2,256,4], index: 1, kind: input, shape index: {}]
  %s2 = inlined_call_operand.vmem [shape: bf16[8,16], index: 2, kind: input, shape index: {}]
  %s3 = inlined_call_operand.vmem [shape: f32[1,16], index: 3, kind: input, shape index: {}]
  %s4 = inlined_call_operand.vmem [shape: f32[1,16], index: 4, kind: input, shape index: {}]
  %s5 = inlined_call_operand.vmem [shape: f32[2,16,128], index: 5, kind: input, shape index: {}]
  %s6 = inlined_call_operand.vmem [shape: bf16[4,128], index: 6, kind: input, shape index: {}]
  %s7 = inlined_call_operand.vmem [shape: f32[1,128], index: 7, kind: input, shape index: {}]
  %s8 = inlined_call_operand.vmem [shape: f32[16,8], index: 8, kind: input, shape index: {}]
  %s9 = inlined_call_operand.hbm [shape: f32[2,256,128], index: 9, kind: output, shape index: {}]
  %s10 = sld [smem:[#allocation0]]
  $region69: #{tpu_custom_call.1} parent=0
    _
  %s12 = ssub.s32 1, %s10
  %s13 = scalar_select 0, %s12, %s10
  $region1: #{tpu_custom_call.1} parent=0
    #allocation2 [shape = 'u8[262144]{0}', space=vmem, size = 0x40000, scoped, tag = 'output window, operand 0']
    #allocation3 [shape = 's32[2]{0}', space=sflag, size = 0x8, scoped, tag = 'scoped memory for tpu_custom_call.1']
    %14 = vsyncpa [#allocation3], 0
    %s15 = scalar_lea.sflag [#allocation3], 1
    %16 = vsyncpa %s15, 0
    loop: start=0, step=1, limit=4
    $region2: #{tpu_custom_call.1} parent=1 // loop_pre_header
      _
    $region3: #{tpu_custom_call.1} parent=1 // loop_header
      %s18 = sphi 0, %s22
      %p19 = scmp.ge.s32.totalorder %s18, 4
      %s28 = sphi 0, %s30
      %s31 = sphi 0, %s28
      %s32 = sphi 0, %s31
      %s48 = sphi 0, %s32
      %s54 = sphi 0, %s56
      %s57 = sphi 0, %s54
      %s58 = sphi 0, %s57
      %s74 = sphi 0, %s58
      %s78 = sphi 0, %s78
      %s80 = sphi 0, %s78
      %s81 = sphi 0, %s80
      %s95 = sphi 0, %s81
      %s99 = sphi 0, %s99
      %s101 = sphi 0, %s99
      %s102 = sphi 0, %s101
      %s116 = sphi 0, %s102
      %s120 = sphi 0, %s120
      %s122 = sphi 0, %s120
      %s123 = sphi 0, %s122
      %s137 = sphi 0, %s123
      %s143 = sphi 0, %s145
      %s146 = sphi 0, %s143
      %s147 = sphi 0, %s146
      %s163 = sphi 0, %s147
      %s167 = sphi 0, %s167
      %s169 = sphi 0, %s167
      %s170 = sphi 0, %s169
      %s184 = sphi 0, %s170
      %s188 = sphi 0, %s188
      %s190 = sphi 0, %s188
      %s191 = sphi 0, %s190
      %s205 = sphi 0, %s191
      %s209 = sphi 0, %s209
      %s211 = sphi 0, %s209
      %s212 = sphi 0, %s211
      %s226 = sphi 0, %s212
      %s232 = sphi 0, %s234
      %s235 = sphi 0, %s232
      %s236 = sphi 0, %s235
      %s252 = sphi 0, %s236
    $region4: #{tpu_custom_call.1} parent=1 // loop_header_branch
      %21 = sbr.rel (%p19) target = $region8
    $region5: #{tpu_custom_call.1} parent=1 // loop_body
      %s23 = ssub.s32 %s18, 1
      %s24 = ssub.s32 %s18, 2
      %s25 = sadd.s32 %s18, 1
      %s26 = ssub.s32 %s18, %s25
      %p27 = scmp.eq.s32.totalorder %s26, 0
      %s29 = sadd.s32 %s28, 1
      %s30 = scalar_select %p27, %s28, %s29
      %p33 = pneg %p27
      %p34 = scmp.eq.s32.totalorder %s18, 1
      %p35 = por %p33, %p34
      %p36 = scmp.ne.s32.totalorder %s28, %s31
      %p37 = scmp.eq.s32.totalorder %s18, 0
      %p38 = por %p36, %p37
      %p39 = scmp.ne.s32.totalorder %s28, %s31
      %p40 = scmp.eq.s32.totalorder %s23, 1
      %p41 = por %p39, %p40
      %p42 = scmp.ne.s32.totalorder %s31, %s32
      %p43 = scmp.eq.s32.totalorder %s23, 0
      %p44 = por %p42, %p43
      %p45 = scmp.ne.s32.totalorder %s31, %s32
      %p46 = scmp.eq.s32.totalorder %s24, 1
      %p47 = por %p45, %p46
      %p49 = scmp.ne.s32.totalorder %s32, %s48
      %p50 = scmp.eq.s32.totalorder %s24, 0
      %p51 = por %p49, %p50
      %s52 = ssub.s32 %s18, %s25
      %p53 = scmp.eq.s32.totalorder %s52, 0
      %s55 = sadd.s32 %s54, 1
      %s56 = scalar_select %p53, %s54, %s55
      %p59 = pneg %p53
      %p60 = scmp.eq.s32.totalorder %s18, 1
      %p61 = por %p59, %p60
      %p62 = scmp.ne.s32.totalorder %s54, %s57
      %p63 = scmp.eq.s32.totalorder %s18, 0
      %p64 = por %p62, %p63
      %p65 = scmp.ne.s32.totalorder %s54, %s57
      %p66 = scmp.eq.s32.totalorder %s23, 1
      %p67 = por %p65, %p66
      %p68 = scmp.ne.s32.totalorder %s57, %s58
      %p69 = scmp.eq.s32.totalorder %s23, 0
      %p70 = por %p68, %p69
      %p71 = scmp.ne.s32.totalorder %s57, %s58
      %p72 = scmp.eq.s32.totalorder %s24, 1
      %p73 = por %p71, %p72
      %p75 = scmp.ne.s32.totalorder %s58, %s74
      %p76 = scmp.eq.s32.totalorder %s24, 0
      %p77 = por %p75, %p76
      %s79 = sadd.s32 %s78, 1
      %p82 = scmp.eq.s32.totalorder %s18, 1
      %p83 = scmp.ne.s32.totalorder %s78, %s80
      %p84 = scmp.eq.s32.totalorder %s18, 0
      %p85 = por %p83, %p84
      %p86 = scmp.ne.s32.totalorder %s78, %s80
      %p87 = scmp.eq.s32.totalorder %s23, 1
      %p88 = por %p86, %p87
      %p89 = scmp.ne.s32.totalorder %s80, %s81
      %p90 = scmp.eq.s32.totalorder %s23, 0
      %p91 = por %p89, %p90
      %p92 = scmp.ne.s32.totalorder %s80, %s81
      %p93 = scmp.eq.s32.totalorder %s24, 1
      %p94 = por %p92, %p93
      %p96 = scmp.ne.s32.totalorder %s81, %s95
      %p97 = scmp.eq.s32.totalorder %s24, 0
      %p98 = por %p96, %p97
      %s100 = sadd.s32 %s99, 1
      %p103 = scmp.eq.s32.totalorder %s18, 1
      %p104 = scmp.ne.s32.totalorder %s99, %s101
      %p105 = scmp.eq.s32.totalorder %s18, 0
      %p106 = por %p104, %p105
      %p107 = scmp.ne.s32.totalorder %s99, %s101
      %p108 = scmp.eq.s32.totalorder %s23, 1
      %p109 = por %p107, %p108
      %p110 = scmp.ne.s32.totalorder %s101, %s102
      %p111 = scmp.eq.s32.totalorder %s23, 0
      %p112 = por %p110, %p111
      %p113 = scmp.ne.s32.totalorder %s101, %s102
      %p114 = scmp.eq.s32.totalorder %s24, 1
      %p115 = por %p113, %p114
      %p117 = scmp.ne.s32.totalorder %s102, %s116
      %p118 = scmp.eq.s32.totalorder %s24, 0
      %p119 = por %p117, %p118
      %s121 = sadd.s32 %s120, 1
      %p124 = scmp.eq.s32.totalorder %s18, 1
      %p125 = scmp.ne.s32.totalorder %s120, %s122
      %p126 = scmp.eq.s32.totalorder %s18, 0
      %p127 = por %p125, %p126
      %p128 = scmp.ne.s32.totalorder %s120, %s122
      %p129 = scmp.eq.s32.totalorder %s23, 1
      %p130 = por %p128, %p129
      %p131 = scmp.ne.s32.totalorder %s122, %s123
      %p132 = scmp.eq.s32.totalorder %s23, 0
      %p133 = por %p131, %p132
      %p134 = scmp.ne.s32.totalorder %s122, %s123
      %p135 = scmp.eq.s32.totalorder %s24, 1
      %p136 = por %p134, %p135
      %p138 = scmp.ne.s32.totalorder %s123, %s137
      %p139 = scmp.eq.s32.totalorder %s24, 0
      %p140 = por %p138, %p139
      %s141 = ssub.s32 %s18, %s25
      %p142 = scmp.eq.s32.totalorder %s141, 0
      %s144 = sadd.s32 %s143, 1
      %s145 = scalar_select %p142, %s143, %s144
      %p148 = pneg %p142
      %p149 = scmp.eq.s32.totalorder %s18, 1
      %p150 = por %p148, %p149
      %p151 = scmp.ne.s32.totalorder %s143, %s146
      %p152 = scmp.eq.s32.totalorder %s18, 0
      %p153 = por %p151, %p152
      %p154 = scmp.ne.s32.totalorder %s143, %s146
      %p155 = scmp.eq.s32.totalorder %s23, 1
      %p156 = por %p154, %p155
      %p157 = scmp.ne.s32.totalorder %s146, %s147
      %p158 = scmp.eq.s32.totalorder %s23, 0
      %p159 = por %p157, %p158
      %p160 = scmp.ne.s32.totalorder %s146, %s147
      %p161 = scmp.eq.s32.totalorder %s24, 1
      %p162 = por %p160, %p161
      %p164 = scmp.ne.s32.totalorder %s147, %s163
      %p165 = scmp.eq.s32.totalorder %s24, 0
      %p166 = por %p164, %p165
      %s168 = sadd.s32 %s167, 1
      %p171 = scmp.eq.s32.totalorder %s18, 1
      %p172 = scmp.ne.s32.totalorder %s167, %s169
      %p173 = scmp.eq.s32.totalorder %s18, 0
      %p174 = por %p172, %p173
      %p175 = scmp.ne.s32.totalorder %s167, %s169
      %p176 = scmp.eq.s32.totalorder %s23, 1
      %p177 = por %p175, %p176
      %p178 = scmp.ne.s32.totalorder %s169, %s170
      %p179 = scmp.eq.s32.totalorder %s23, 0
      %p180 = por %p178, %p179
      %p181 = scmp.ne.s32.totalorder %s169, %s170
      %p182 = scmp.eq.s32.totalorder %s24, 1
      %p183 = por %p181, %p182
      %p185 = scmp.ne.s32.totalorder %s170, %s184
      %p186 = scmp.eq.s32.totalorder %s24, 0
      %p187 = por %p185, %p186
      %s189 = sadd.s32 %s188, 1
      %p192 = scmp.eq.s32.totalorder %s18, 1
      %p193 = scmp.ne.s32.totalorder %s188, %s190
      %p194 = scmp.eq.s32.totalorder %s18, 0
      %p195 = por %p193, %p194
      %p196 = scmp.ne.s32.totalorder %s188, %s190
      %p197 = scmp.eq.s32.totalorder %s23, 1
      %p198 = por %p196, %p197
      %p199 = scmp.ne.s32.totalorder %s190, %s191
      %p200 = scmp.eq.s32.totalorder %s23, 0
      %p201 = por %p199, %p200
      %p202 = scmp.ne.s32.totalorder %s190, %s191
      %p203 = scmp.eq.s32.totalorder %s24, 1
      %p204 = por %p202, %p203
      %p206 = scmp.ne.s32.totalorder %s191, %s205
      %p207 = scmp.eq.s32.totalorder %s24, 0
      %p208 = por %p206, %p207
      %s210 = sadd.s32 %s209, 1
      %p213 = scmp.eq.s32.totalorder %s18, 1
      %p214 = scmp.ne.s32.totalorder %s209, %s211
      %p215 = scmp.eq.s32.totalorder %s18, 0
      %p216 = por %p214, %p215
      %p217 = scmp.ne.s32.totalorder %s209, %s211
      %p218 = scmp.eq.s32.totalorder %s23, 1
      %p219 = por %p217, %p218
      %p220 = scmp.ne.s32.totalorder %s211, %s212
      %p221 = scmp.eq.s32.totalorder %s23, 0
      %p222 = por %p220, %p221
      %p223 = scmp.ne.s32.totalorder %s211, %s212
      %p224 = scmp.eq.s32.totalorder %s24, 1
      %p225 = por %p223, %p224
      %p227 = scmp.ne.s32.totalorder %s212, %s226
      %p228 = scmp.eq.s32.totalorder %s24, 0
      %p229 = por %p227, %p228
      %s230 = ssub.s32 %s18, %s25
      %p231 = scmp.eq.s32.totalorder %s230, 0
      %s233 = sadd.s32 %s232, 1
      %s234 = scalar_select %p231, %s232, %s233
      %p237 = pneg %p231
      %p238 = scmp.eq.s32.totalorder %s18, 1
      %p239 = por %p237, %p238
      %p240 = scmp.ne.s32.totalorder %s232, %s235
      %p241 = scmp.eq.s32.totalorder %s18, 0
      %p242 = por %p240, %p241
      %p243 = scmp.ne.s32.totalorder %s232, %s235
      %p244 = scmp.eq.s32.totalorder %s23, 1
      %p245 = por %p243, %p244
      %p246 = scmp.ne.s32.totalorder %s235, %s236
      %p247 = scmp.eq.s32.totalorder %s23, 0
      %p248 = por %p246, %p247
      %p249 = scmp.ne.s32.totalorder %s235, %s236
      %p250 = scmp.eq.s32.totalorder %s24, 1
      %p251 = por %p249, %p250
      %p253 = scmp.ne.s32.totalorder %s236, %s252
      %p254 = scmp.eq.s32.totalorder %s24, 0
      %p255 = por %p253, %p254
      %p256 = scmp.le.s32.totalorder 1, %s18
      %p257 = scmp.lt.s32.totalorder %s18, 3
      %p258 = pnand %p256, %p257
      %p259 = pneg %p258
      // Predicated region
      $region9: #{tpu_custom_call.1} parent=5 // pred_check
        _
      $region10: #{tpu_custom_call.1} parent=5 // pred_check_branch
        %261 = sbr.rel (%p258) target = $region12
      $region11: #{tpu_custom_call.1} parent=5 // pred_region
        %s262 = ssub.s32 %s18, 1
        // Predicated region
        $region13: #{tpu_custom_call.1} parent=11 // pred_check
          %p263 = pneg %p91
        $region14: #{tpu_custom_call.1} parent=11 // pred_check_branch
          %265 = sbr.rel (%p263) target = $region16
        $region15: #{tpu_custom_call.1} parent=11 // pred_region
          _
        $region16: #{tpu_custom_call.1} parent=11 // pred_fallthru
          _
        // Predicated region
        $region17: #{tpu_custom_call.1} parent=11 // pred_check
          %p266 = pneg %p112
        $region18: #{tpu_custom_call.1} parent=11 // pred_check_branch
          %268 = sbr.rel (%p266) target = $region20
        $region19: #{tpu_custom_call.1} parent=11 // pred_region
          _
        $region20: #{tpu_custom_call.1} parent=11 // pred_fallthru
          _
        // Predicated region
        $region21: #{tpu_custom_call.1} parent=11 // pred_check
          %p269 = pneg %p133
        $region22: #{tpu_custom_call.1} parent=11 // pred_check_branch
          %271 = sbr.rel (%p269) target = $region24
        $region23: #{tpu_custom_call.1} parent=11 // pred_region
          _
        $region24: #{tpu_custom_call.1} parent=11 // pred_fallthru
          _
        // Predicated region
        $region25: #{tpu_custom_call.1} parent=11 // pred_check
          %p272 = pneg %p180
        $region26: #{tpu_custom_call.1} parent=11 // pred_check_branch
          %274 = sbr.rel (%p272) target = $region28
        $region27: #{tpu_custom_call.1} parent=11 // pred_region
          _
        $region28: #{tpu_custom_call.1} parent=11 // pred_fallthru
          _
        // Predicated region
        $region29: #{tpu_custom_call.1} parent=11 // pred_check
          %p275 = pneg %p201
        $region30: #{tpu_custom_call.1} parent=11 // pred_check_branch
          %277 = sbr.rel (%p275) target = $region32
        $region31: #{tpu_custom_call.1} parent=11 // pred_region
          _
        $region32: #{tpu_custom_call.1} parent=11 // pred_fallthru
          _
        // Predicated region
        $region33: #{tpu_custom_call.1} parent=11 // pred_check
          %p278 = pneg %p222
        $region34: #{tpu_custom_call.1} parent=11 // pred_check_branch
          %280 = sbr.rel (%p278) target = $region36
        $region35: #{tpu_custom_call.1} parent=11 // pred_region
          _
        $region36: #{tpu_custom_call.1} parent=11 // pred_fallthru
          _
      $region12: #{tpu_custom_call.1} parent=5 // pred_fallthru
        _
      %p281 = scmp.lt.s32.totalorder %s18, 2
      // Predicated region
      $region37: #{tpu_custom_call.1} parent=5 // pred_check
        %p282 = pneg %p281
      $region38: #{tpu_custom_call.1} parent=5 // pred_check_branch
        %284 = sbr.rel (%p282) target = $region40
      $region39: #{tpu_custom_call.1} parent=5 // pred_region
        // Predicated region
        $region41: #{tpu_custom_call.1} parent=39 // pred_check
          %p285 = pneg %p38
        $region42: #{tpu_custom_call.1} parent=39 // pred_check_branch
          %287 = sbr.rel (%p285) target = $region44
        $region43: #{tpu_custom_call.1} parent=39 // pred_region
          %p288 = scmp.lt.s32.totalorder %s18, 1
          %s289 = scalar_select %p288, %s18, 1
          %s290 = smul.addr %s289, 8
          %s291 = smul.addr %s290, 4
          %s292 = scalar_lea.vmem %s0, %s291
        $region44: #{tpu_custom_call.1} parent=39 // pred_fallthru
          _
        // Predicated region
        $region45: #{tpu_custom_call.1} parent=39 // pred_check
          %p293 = pneg %p64
        $region46: #{tpu_custom_call.1} parent=39 // pred_check_branch
          %295 = sbr.rel (%p293) target = $region48
        $region47: #{tpu_custom_call.1} parent=39 // pred_region
          %p296 = scmp.lt.s32.totalorder %s18, 1
          %s297 = scalar_select %p296, %s18, 1
          %s298 = smul.addr %s297, 32
          %s299 = smul.addr %s298, 4
          %s300 = scalar_lea.vmem %s1, %s299
        $region48: #{tpu_custom_call.1} parent=39 // pred_fallthru
          _
        // Predicated region
        $region49: #{tpu_custom_call.1} parent=39 // pred_check
          %p301 = pneg %p153
        $region50: #{tpu_custom_call.1} parent=39 // pred_check_branch
          %303 = sbr.rel (%p301) target = $region52
        $region51: #{tpu_custom_call.1} parent=39 // pred_region
          %p304 = scmp.lt.s32.totalorder %s18, 1
          %s305 = scalar_select %p304, %s18, 1
          %s306 = smul.addr %s305, 2
          %s307 = smul.addr %s306, 8
          %s308 = scalar_lea.vmem %s5, %s307
        $region52: #{tpu_custom_call.1} parent=39 // pred_fallthru
          _
      $region40: #{tpu_custom_call.1} parent=5 // pred_fallthru
        _
      %p309 = scmp.le.s32.totalorder 1, %s18
      %p310 = scmp.lt.s32.totalorder %s18, 3
      %p311 = pnand %p309, %p310
      %p312 = pneg %p311
      // Predicated region
      $region53: #{tpu_custom_call.1} parent=5 // pred_check
        _
      $region54: #{tpu_custom_call.1} parent=5 // pred_check_branch
        %314 = sbr.rel (%p311) target = $region56
      $region55: #{tpu_custom_call.1} parent=5 // pred_region
        %s315 = ssub.s32 %s18, 1
        %p316 = scmp.lt.s32.totalorder %s23, 1
        %s317 = scalar_select %p316, %s23, 1
        %s318 = smul.addr %s317, 8
        %s319 = smul.addr %s318, 4
        %s320 = scalar_lea.vmem %s0, %s319
        %p321 = pneg %p44
        %p322 = pneg %p41
        %p323 = scmp.lt.s32.totalorder %s23, 1
        %s324 = scalar_select %p323, %s23, 1
        %s325 = smul.addr %s324, 32
        %s326 = smul.addr %s325, 4
        %s327 = scalar_lea.vmem %s1, %s326
        %p328 = pneg %p70
        %p329 = pneg %p67
        %p330 = pneg %p91
        %p331 = pneg %p88
        %p332 = pneg %p112
        %p333 = pneg %p109
        %p334 = pneg %p133
        %p335 = pneg %p130
        %p336 = scmp.lt.s32.totalorder %s23, 1
        %s337 = scalar_select %p336, %s23, 1
        %s338 = smul.addr %s337, 2
        %s339 = smul.addr %s338, 8
        %s340 = scalar_lea.vmem %s5, %s339
        %p341 = pneg %p159
        %p342 = pneg %p156
        %p343 = pneg %p180
        %p344 = pneg %p177
        %p345 = pneg %p201
        %p346 = pneg %p198
        %p347 = pneg %p222
        %p348 = pneg %p219
        %p349 = pneg %p248
        %p350 = pneg %p245
        %s351 = sand.u32 %s235, 1
        %s352 = scalar_lea.sflag [#allocation3], %s351
        %s353 = sand.u32 %s235, 1
        %s354 = smul.addr %s353, 256
        %s355 = scalar_lea.vmem [#allocation2], %s354
        %p356 = scmp.lt.s32.totalorder %s23, 1
        %s357 = scalar_select %p356, %s23, 1
        %s358 = smul.addr %s357, 8
        %s359 = smul.addr %s358, 4
        %s360 = scalar_lea.vmem %s0, %s359
        %p361 = scmp.lt.s32.totalorder %s23, 1
        %s362 = scalar_select %p361, %s23, 1
        %s363 = smul.addr %s362, 32
        %s364 = smul.addr %s363, 4
        %s365 = scalar_lea.vmem %s1, %s364
        %p366 = scmp.lt.s32.totalorder %s23, 1
        %s367 = scalar_select %p366, %s23, 1
        %s368 = smul.addr %s367, 2
        %s369 = smul.addr %s368, 8
        %s370 = scalar_lea.vmem %s5, %s369
        %v372 = vld [vmem:[%s360] sm:$0xf]
        %v373 = vld [vmem:[%s360 + $0x4] sm:$0xf]
        %v374 = vld [vmem:[%s360 + $0x8] sm:$0xf]
        %v375 = vld [vmem:[%s360 + $0xc] sm:$0xf]
        %v376 = vld [vmem:[%s360 + $0x10] sm:$0xf]
        %v377 = vld [vmem:[%s360 + $0x14] sm:$0xf]
        %v378 = vld [vmem:[%s360 + $0x18] sm:$0xf]
        %v379 = vld [vmem:[%s360 + $0x1c] sm:$0xf]
        %v380 = vld [vmem:[%s2] sm:$0xf]
        %v389 = vunpack.c.l.b16 %v372
        %v390 = vunpack.c.l.b16 %v373
        %v391 = vunpack.c.l.b16 %v374
        %v392 = vunpack.c.l.b16 %v375
        %v393 = vunpack.c.l.b16 %v376
        %v394 = vunpack.c.l.b16 %v377
        %v395 = vunpack.c.l.b16 %v378
        %v396 = vunpack.c.l.b16 %v379
        %v397 = vpack.c.b16 %v390, %v389
        %v398 = vpack.c.b16 %v392, %v391
        %v399 = vpack.c.b16 %v394, %v393
        %v400 = vpack.c.b16 %v396, %v395
        %vm401 = vcmask 64512
        %v403 = vsel %vm401, %v397, 0
        %v406 = vsel %vm401, %v398, 0
        %v409 = vsel %vm401, %v399, 0
        %v412 = vsel %vm401, %v400, 0
        %vm414 = vcmask 1043456
        %v416 = vsel %vm414, %v380, 0
        %418 = vmatprep.subr.bf16.mxu0 0
        %419 = vmatpush1.bf16.msra.mxu0 %v416
        %420 = vmatprep.subr.bf16.mxu0 0
        %421 = vmatpush1.bf16.msra.mxu0 0
        %422 = vmatprep.subr.bf16.mxu0 0
        %423 = vmatpush1.bf16.msra.mxu0 0
        %424 = vmatprep.subr.bf16.mxu0 0
        %425 = vmatpush1.bf16.msra.mxu0 0
        %426 = vmatprep.subr.bf16.mxu0 0
        %427 = vmatpush1.bf16.msra.mxu0 0
        %428 = vmatprep.subr.bf16.mxu0 0
        %429 = vmatpush1.bf16.msra.mxu0 0
        %430 = vmatprep.subr.bf16.mxu0 0
        %431 = vmatpush1.bf16.msra.mxu0 0
        %432 = vmatprep.subr.bf16.mxu0 0
        %433 = vmatpush1.bf16.msra.mxu0 0
        %434 = vmatprep.subr.bf16.mxu0 0
        %435 = vmatpush1.bf16.msra.mxu0 0
        %436 = vmatprep.subr.bf16.mxu0 0
        %437 = vmatpush1.bf16.msra.mxu0 0
        %438 = vmatprep.subr.bf16.mxu0 0
        %439 = vmatpush1.bf16.msra.mxu0 0
        %440 = vmatprep.subr.bf16.mxu0 0
        %441 = vmatpush1.bf16.msra.mxu0 0
        %442 = vmatprep.subr.bf16.mxu0 0
        %443 = vmatpush1.bf16.msra.mxu0 0
        %444 = vmatprep.subr.bf16.mxu0 0
        %445 = vmatpush1.bf16.msra.mxu0 0
        %446 = vmatprep.subr.bf16.mxu0 0
        %447 = vmatpush1.bf16.msra.mxu0 0
        %448 = vmatprep.subr.bf16.mxu0 0
        %449 = vmatpush1.bf16.msra.mxu0 0
        %450 = vmatprep.mubr.bf16.mxu0 0
        %451 = vmatmul.mubr.bf16.gmra.mrb[0].mxu0 %v403
        %v452 = vpop.f32.mrb[0].mxu0
        %v453 = vadd.f32 0.0, %v452
        %v454 = vpop.f32.mrb[0].mxu0
        %v455 = vpop.f32.mrb[0].mxu0
        %v456 = vadd.f32 0.0, %v455
        %v457 = vpop.f32.mrb[0].mxu0
        %458 = vmatprep.mubr.bf16.mxu0 0
        %459 = vmatmul.mubr.bf16.gmra.mrb[0].mxu0 %v406
        %v460 = vpop.f32.mrb[0].mxu0
        %v461 = vadd.f32 0.0, %v460
        %v462 = vpop.f32.mrb[0].mxu0
        %v463 = vpop.f32.mrb[0].mxu0
        %v464 = vadd.f32 0.0, %v463
        %v465 = vpop.f32.mrb[0].mxu0
        %466 = vmatprep.mubr.bf16.mxu0 0
        %467 = vmatmul.mubr.bf16.gmra.mrb[0].mxu0 %v409
        %v468 = vpop.f32.mrb[0].mxu0
        %v469 = vadd.f32 0.0, %v468
        %v470 = vpop.f32.mrb[0].mxu0
        %v471 = vpop.f32.mrb[0].mxu0
        %v472 = vadd.f32 0.0, %v471
        %v473 = vpop.f32.mrb[0].mxu0
        %474 = vmatprep.mubr.bf16.mxu0 0
        %475 = vmatmul.mubr.bf16.gmra.mrb[0].mxu0 %v412
        %v476 = vpop.f32.mrb[0].mxu0
        %v477 = vadd.f32 0.0, %v476
        %v478 = vpop.f32.mrb[0].mxu0
        %v479 = vpop.f32.mrb[0].mxu0
        %v480 = vadd.f32 0.0, %v479
        %v481 = vpop.f32.mrb[0].mxu0
        %482 = vdwg.mxu0
        %v483 = vld [vmem:[%s3] sm:$0x1]
        %v485 = vlaneseq
        %v486 = vshrl.u32 %v485, 7
        %v487 = vsub.s32 0, %v486
        %v488 = vrot.slane %v483, %v487
        %v490 = vmul.f32 %v453, %v488
        %v491 = vmul.f32 %v456, %v488
        %v492 = vmul.f32 %v461, %v488
        %v493 = vmul.f32 %v464, %v488
        %v494 = vmul.f32 %v469, %v488
        %v495 = vmul.f32 %v472, %v488
        %v496 = vmul.f32 %v477, %v488
        %v497 = vmul.f32 %v480, %v488
        %v498 = vld [vmem:[%s4] sm:$0x1]
        %v500 = vlaneseq
        %v501 = vshrl.u32 %v500, 7
        %v502 = vsub.s32 0, %v501
        %v503 = vrot.slane %v498, %v502
        %v505 = vadd.f32 %v490, %v503
        %v506 = vadd.f32 %v491, %v503
        %v507 = vadd.f32 %v492, %v503
        %v508 = vadd.f32 %v493, %v503
        %v509 = vadd.f32 %v494, %v503
        %v510 = vadd.f32 %v495, %v503
        %v511 = vadd.f32 %v496, %v503
        %v512 = vadd.f32 %v497, %v503
        %v513 = vmax.f32 %v505, 0.0
        %v514 = vmax.f32 %v506, 0.0
        %v515 = vmax.f32 %v507, 0.0
        %v516 = vmax.f32 %v508, 0.0
        %v517 = vmax.f32 %v509, 0.0
        %v518 = vmax.f32 %v510, 0.0
        %v519 = vmax.f32 %v511, 0.0
        %v520 = vmax.f32 %v512, 0.0
        %v521 = vld [vmem:[%s370] sm:$0xff]
        %v522 = vld [vmem:[%s370 + $0x8] sm:$0xff]
        %vm523 = vcmask 130048
        %v525 = vsel %vm523, %v513, 0
        %v528 = vsel %vm523, %v514, 0
        %v531 = vsel %vm523, %v515, 0
        %v534 = vsel %vm523, %v516, 0
        %v537 = vsel %vm523, %v517, 0
        %v540 = vsel %vm523, %v518, 0
        %v543 = vsel %vm523, %v519, 0
        %v546 = vsel %vm523, %v520, 0
        %548 = vmatprep.subr.mxu0 0.0
        %549 = vmatpush1.msra.mxu0 %v521
        %550 = vmatprep.subr.mxu0 0.0
        %551 = vmatpush1.msra.mxu0 %v522
        %552 = vmatprep.subr.mxu0 0.0
        %553 = vmatpush1.msra.mxu0 0.0
        %554 = vmatprep.subr.mxu0 0.0
        %555 = vmatpush1.msra.mxu0 0.0
        %556 = vmatprep.subr.mxu0 0.0
        %557 = vmatpush1.msra.mxu0 0.0
        %558 = vmatprep.subr.mxu0 0.0
        %559 = vmatpush1.msra.mxu0 0.0
        %560 = vmatprep.subr.mxu0 0.0
        %561 = vmatpush1.msra.mxu0 0.0
        %562 = vmatprep.subr.mxu0 0.0
        %563 = vmatpush1.msra.mxu0 0.0
        %564 = vmatprep.subr.mxu0 0.0
        %565 = vmatpush1.msra.mxu0 0.0
        %566 = vmatprep.subr.mxu0 0.0
        %567 = vmatpush1.msra.mxu0 0.0
        %568 = vmatprep.subr.mxu0 0.0
        %569 = vmatpush1.msra.mxu0 0.0
        %570 = vmatprep.subr.mxu0 0.0
        %571 = vmatpush1.msra.mxu0 0.0
        %572 = vmatprep.subr.mxu0 0.0
        %573 = vmatpush1.msra.mxu0 0.0
        %574 = vmatprep.subr.mxu0 0.0
        %575 = vmatpush1.msra.mxu0 0.0
        %576 = vmatprep.subr.mxu0 0.0
        %577 = vmatpush1.msra.mxu0 0.0
        %578 = vmatprep.subr.mxu0 0.0
        %579 = vmatpush1.msra.mxu0 0.0
        %580 = vmatprep.subr.mxu0 0.0
        %581 = vmatpush1.msra.mxu0 0.0
        %582 = vmatprep.subr.mxu0 0.0
        %583 = vmatpush1.msra.mxu0 0.0
        %584 = vmatprep.subr.mxu0 0.0
        %585 = vmatpush1.msra.mxu0 0.0
        %586 = vmatprep.subr.mxu0 0.0
        %587 = vmatpush1.msra.mxu0 0.0
        %588 = vmatprep.subr.mxu0 0.0
        %589 = vmatpush1.msra.mxu0 0.0
        %590 = vmatprep.subr.mxu0 0.0
        %591 = vmatpush1.msra.mxu0 0.0
        %592 = vmatprep.subr.mxu0 0.0
        %593 = vmatpush1.msra.mxu0 0.0
        %594 = vmatprep.subr.mxu0 0.0
        %595 = vmatpush1.msra.mxu0 0.0
        %596 = vmatprep.subr.mxu0 0.0
        %597 = vmatpush1.msra.mxu0 0.0
        %598 = vmatprep.subr.mxu0 0.0
        %599 = vmatpush1.msra.mxu0 0.0
        %600 = vmatprep.subr.mxu0 0.0
        %601 = vmatpush1.msra.mxu0 0.0
        %602 = vmatprep.subr.mxu0 0.0
        %603 = vmatpush1.msra.mxu0 0.0
        %604 = vmatprep.subr.mxu0 0.0
        %605 = vmatpush1.msra.mxu0 0.0
        %606 = vmatprep.subr.mxu0 0.0
        %607 = vmatpush1.msra.mxu0 0.0
        %608 = vmatprep.subr.mxu0 0.0
        %609 = vmatpush1.msra.mxu0 0.0
        %610 = vmatprep.subr.mxu0 0.0
        %611 = vmatpush1.msra.mxu0 0.0
        %612 = vmatprep.mubr.f32.mxu0 0.0
        %613 = vmatmul.mubr.f32.gmra.mrb[0].mxu0 %v525
        %v614 = vpop.f32.mrb[0].mxu0
        %v615 = vadd.f32 0.0, %v614
        %v616 = vpop.f32.mrb[0].mxu0
        %617 = vmatprep.mubr.f32.mxu0 0.0
        %618 = vmatmul.mubr.f32.gmra.mrb[0].mxu0 %v528
        %v619 = vpop.f32.mrb[0].mxu0
        %v620 = vadd.f32 0.0, %v619
        %v621 = vpop.f32.mrb[0].mxu0
        %622 = vmatprep.mubr.f32.mxu0 0.0
        %623 = vmatmul.mubr.f32.gmra.mrb[0].mxu0 %v531
        %v624 = vpop.f32.mrb[0].mxu0
        %v625 = vadd.f32 0.0, %v624
        %v626 = vpop.f32.mrb[0].mxu0
        %627 = vmatprep.mubr.f32.mxu0 0.0
        %628 = vmatmul.mubr.f32.gmra.mrb[0].mxu0 %v534
        %v629 = vpop.f32.mrb[0].mxu0
        %v630 = vadd.f32 0.0, %v629
        %v631 = vpop.f32.mrb[0].mxu0
        %632 = vmatprep.mubr.f32.mxu0 0.0
        %633 = vmatmul.mubr.f32.gmra.mrb[0].mxu0 %v537
        %v634 = vpop.f32.mrb[0].mxu0
        %v635 = vadd.f32 0.0, %v634
        %v636 = vpop.f32.mrb[0].mxu0
        %637 = vmatprep.mubr.f32.mxu0 0.0
        %638 = vmatmul.mubr.f32.gmra.mrb[0].mxu0 %v540
        %v639 = vpop.f32.mrb[0].mxu0
        %v640 = vadd.f32 0.0, %v639
        %v641 = vpop.f32.mrb[0].mxu0
        %642 = vmatprep.mubr.f32.mxu0 0.0
        %643 = vmatmul.mubr.f32.gmra.mrb[0].mxu0 %v543
        %v644 = vpop.f32.mrb[0].mxu0
        %v645 = vadd.f32 0.0, %v644
        %v646 = vpop.f32.mrb[0].mxu0
        %647 = vmatprep.mubr.f32.mxu0 0.0
        %648 = vmatmul.mubr.f32.gmra.mrb[0].mxu0 %v546
        %v649 = vpop.f32.mrb[0].mxu0
        %v650 = vadd.f32 0.0, %v649
        %v651 = vpop.f32.mrb[0].mxu0
        %652 = vdwg.mxu0
        %v653 = vld [vmem:[%s365] sm:$0xf]
        %v654 = vld [vmem:[%s365 + $0x4] sm:$0xf]
        %v655 = vld [vmem:[%s365 + $0x8] sm:$0xf]
        %v656 = vld [vmem:[%s365 + $0xc] sm:$0xf]
        %v657 = vld [vmem:[%s365 + $0x10] sm:$0xf]
        %v658 = vld [vmem:[%s365 + $0x14] sm:$0xf]
        %v659 = vld [vmem:[%s365 + $0x18] sm:$0xf]
        %v660 = vld [vmem:[%s365 + $0x1c] sm:$0xf]
        %v661 = vld [vmem:[%s365 + $0x20] sm:$0xf]
        %v662 = vld [vmem:[%s365 + $0x24] sm:$0xf]
        %v663 = vld [vmem:[%s365 + $0x28] sm:$0xf]
        %v664 = vld [vmem:[%s365 + $0x2c] sm:$0xf]
        %v665 = vld [vmem:[%s365 + $0x30] sm:$0xf]
        %v666 = vld [vmem:[%s365 + $0x34] sm:$0xf]
        %v667 = vld [vmem:[%s365 + $0x38] sm:$0xf]
        %v668 = vld [vmem:[%s365 + $0x3c] sm:$0xf]
        %v669 = vld [vmem:[%s365 + $0x40] sm:$0xf]
        %v670 = vld [vmem:[%s365 + $0x44] sm:$0xf]
        %v671 = vld [vmem:[%s365 + $0x48] sm:$0xf]
        %v672 = vld [vmem:[%s365 + $0x4c] sm:$0xf]
        %v673 = vld [vmem:[%s365 + $0x50] sm:$0xf]
        %v674 = vld [vmem:[%s365 + $0x54] sm:$0xf]
        %v675 = vld [vmem:[%s365 + $0x58] sm:$0xf]
        %v676 = vld [vmem:[%s365 + $0x5c] sm:$0xf]
        %v677 = vld [vmem:[%s365 + $0x60] sm:$0xf]
        %v678 = vld [vmem:[%s365 + $0x64] sm:$0xf]
        %v679 = vld [vmem:[%s365 + $0x68] sm:$0xf]
        %v680 = vld [vmem:[%s365 + $0x6c] sm:$0xf]
        %v681 = vld [vmem:[%s365 + $0x70] sm:$0xf]
        %v682 = vld [vmem:[%s365 + $0x74] sm:$0xf]
        %v683 = vld [vmem:[%s365 + $0x78] sm:$0xf]
        %v684 = vld [vmem:[%s365 + $0x7c] sm:$0xf]
        %v685 = vld [vmem:[%s6] sm:$0x3]
        %v686 = vld [vmem:[%s7] sm:$0x1]
        %v688 = vlaneseq
        %v689 = vshrl.u32 %v688, 7
        %v690 = vsub.s32 0, %v689
        %v691 = vrot.slane %v686, %v690
        %v725 = vunpack.c.l.b16 %v653
        %v726 = vunpack.c.l.b16 %v654
        %v727 = vunpack.c.l.b16 %v655
        %v728 = vunpack.c.l.b16 %v656
        %v729 = vunpack.c.l.b16 %v657
        %v730 = vunpack.c.l.b16 %v658
        %v731 = vunpack.c.l.b16 %v659
        %v732 = vunpack.c.l.b16 %v660
        %v733 = vunpack.c.l.b16 %v661
        %v734 = vunpack.c.l.b16 %v662
        %v735 = vunpack.c.l.b16 %v663
        %v736 = vunpack.c.l.b16 %v664
        %v737 = vunpack.c.l.b16 %v665
        %v738 = vunpack.c.l.b16 %v666
        %v739 = vunpack.c.l.b16 %v667
        %v740 = vunpack.c.l.b16 %v668
        %v741 = vunpack.c.l.b16 %v669
        %v742 = vunpack.c.l.b16 %v670
        %v743 = vunpack.c.l.b16 %v671
        %v744 = vunpack.c.l.b16 %v672
        %v745 = vunpack.c.l.b16 %v673
        %v746 = vunpack.c.l.b16 %v674
        %v747 = vunpack.c.l.b16 %v675
        %v748 = vunpack.c.l.b16 %v676
        %v749 = vunpack.c.l.b16 %v677
        %v750 = vunpack.c.l.b16 %v678
        %v751 = vunpack.c.l.b16 %v679
        %v752 = vunpack.c.l.b16 %v680
        %v753 = vunpack.c.l.b16 %v681
        %v754 = vunpack.c.l.b16 %v682
        %v755 = vunpack.c.l.b16 %v683
        %v756 = vunpack.c.l.b16 %v684
        %v757 = vpack.c.b16 %v726, %v725
        %v758 = vpack.c.b16 %v728, %v727
        %v759 = vpack.c.b16 %v730, %v729
        %v760 = vpack.c.b16 %v732, %v731
        %v761 = vpack.c.b16 %v734, %v733
        %v762 = vpack.c.b16 %v736, %v735
        %v763 = vpack.c.b16 %v738, %v737
        %v764 = vpack.c.b16 %v740, %v739
        %v765 = vpack.c.b16 %v742, %v741
        %v766 = vpack.c.b16 %v744, %v743
        %v767 = vpack.c.b16 %v746, %v745
        %v768 = vpack.c.b16 %v748, %v747
        %v769 = vpack.c.b16 %v750, %v749
        %v770 = vpack.c.b16 %v752, %v751
        %v771 = vpack.c.b16 %v754, %v753
        %v772 = vpack.c.b16 %v756, %v755
        %vm773 = vcmask 31744
        %v775 = vsel %vm773, %v757, 0
        %v778 = vsel %vm773, %v758, 0
        %v781 = vsel %vm773, %v759, 0
        %v784 = vsel %vm773, %v760, 0
        %v787 = vsel %vm773, %v761, 0
        %v790 = vsel %vm773, %v762, 0
        %v793 = vsel %vm773, %v763, 0
        %v796 = vsel %vm773, %v764, 0
        %v799 = vsel %vm773, %v765, 0
        %v802 = vsel %vm773, %v766, 0
        %v805 = vsel %vm773, %v767, 0
        %v808 = vsel %vm773, %v768, 0
        %v811 = vsel %vm773, %v769, 0
        %v814 = vsel %vm773, %v770, 0
        %v817 = vsel %vm773, %v771, 0
        %v820 = vsel %vm773, %v772, 0
        %vm822 = vcmask 1041408
        %v824 = vsel %vm822, %v685, 0
        %826 = vmatprep.subr.bf16.mxu0 0
        %827 = vmatpush1.bf16.msra.mxu0 %v824
        %828 = vmatprep.subr.bf16.mxu0 0
        %829 = vmatpush1.bf16.msra.mxu0 0
        %830 = vmatprep.subr.bf16.mxu0 0
        %831 = vmatpush1.bf16.msra.mxu0 0
        %832 = vmatprep.subr.bf16.mxu0 0
        %833 = vmatpush1.bf16.msra.mxu0 0
        %834 = vmatprep.subr.bf16.mxu0 0
        %835 = vmatpush1.bf16.msra.mxu0 0
        %836 = vmatprep.subr.bf16.mxu0 0
        %837 = vmatpush1.bf16.msra.mxu0 0
        %838 = vmatprep.subr.bf16.mxu0 0
        %839 = vmatpush1.bf16.msra.mxu0 0
        %840 = vmatprep.subr.bf16.mxu0 0
        %841 = vmatpush1.bf16.msra.mxu0 0
        %842 = vmatprep.subr.bf16.mxu0 0
        %843 = vmatpush1.bf16.msra.mxu0 0
        %844 = vmatprep.subr.bf16.mxu0 0
        %845 = vmatpush1.bf16.msra.mxu0 0
        %846 = vmatprep.subr.bf16.mxu0 0
        %847 = vmatpush1.bf16.msra.mxu0 0
        %848 = vmatprep.subr.bf16.mxu0 0
        %849 = vmatpush1.bf16.msra.mxu0 0
        %850 = vmatprep.subr.bf16.mxu0 0
        %851 = vmatpush1.bf16.msra.mxu0 0
        %852 = vmatprep.subr.bf16.mxu0 0
        %853 = vmatpush1.bf16.msra.mxu0 0
        %854 = vmatprep.subr.bf16.mxu0 0
        %855 = vmatpush1.bf16.msra.mxu0 0
        %856 = vmatprep.subr.bf16.mxu0 0
        %857 = vmatpush1.bf16.msra.mxu0 0
        %858 = vmatprep.mubr.bf16.mxu0 0
        %859 = vmatmul.mubr.bf16.gmra.mrb[0].mxu0 %v775
        %v860 = vpop.f32.mrb[0].mxu0
        %v861 = vadd.f32 %v691, %v860
        %v862 = vpop.f32.mrb[0].mxu0
        %v863 = vpop.f32.mrb[0].mxu0
        %v864 = vadd.f32 %v691, %v863
        %v865 = vpop.f32.mrb[0].mxu0
        %866 = vmatprep.mubr.bf16.mxu0 0
        %867 = vmatmul.mubr.bf16.gmra.mrb[0].mxu0 %v778
        %v868 = vpop.f32.mrb[0].mxu0
        %v869 = vadd.f32 %v691, %v868
        %v870 = vpop.f32.mrb[0].mxu0
        %v871 = vpop.f32.mrb[0].mxu0
        %v872 = vadd.f32 %v691, %v871
        %v873 = vpop.f32.mrb[0].mxu0
        %874 = vmatprep.mubr.bf16.mxu0 0
        %875 = vmatmul.mubr.bf16.gmra.mrb[0].mxu0 %v781
        %v876 = vpop.f32.mrb[0].mxu0
        %v877 = vadd.f32 %v691, %v876
        %v878 = vpop.f32.mrb[0].mxu0
        %v879 = vpop.f32.mrb[0].mxu0
        %v880 = vadd.f32 %v691, %v879
        %v881 = vpop.f32.mrb[0].mxu0
        %882 = vmatprep.mubr.bf16.mxu0 0
        %883 = vmatmul.mubr.bf16.gmra.mrb[0].mxu0 %v784
        %v884 = vpop.f32.mrb[0].mxu0
        %v885 = vadd.f32 %v691, %v884
        %v886 = vpop.f32.mrb[0].mxu0
        %v887 = vpop.f32.mrb[0].mxu0
        %v888 = vadd.f32 %v691, %v887
        %v889 = vpop.f32.mrb[0].mxu0
        %890 = vmatprep.mubr.bf16.mxu0 0
        %891 = vmatmul.mubr.bf16.gmra.mrb[0].mxu0 %v787
        %v892 = vpop.f32.mrb[0].mxu0
        %v893 = vadd.f32 %v691, %v892
        %v894 = vpop.f32.mrb[0].mxu0
        %v895 = vpop.f32.mrb[0].mxu0
        %v896 = vadd.f32 %v691, %v895
        %v897 = vpop.f32.mrb[0].mxu0
        %898 = vmatprep.mubr.bf16.mxu0 0
        %899 = vmatmul.mubr.bf16.gmra.mrb[0].mxu0 %v790
        %v900 = vpop.f32.mrb[0].mxu0
        %v901 = vadd.f32 %v691, %v900
        %v902 = vpop.f32.mrb[0].mxu0
        %v903 = vpop.f32.mrb[0].mxu0
        %v904 = vadd.f32 %v691, %v903
        %v905 = vpop.f32.mrb[0].mxu0
        %906 = vmatprep.mubr.bf16.mxu0 0
        %907 = vmatmul.mubr.bf16.gmra.mrb[0].mxu0 %v793
        %v908 = vpop.f32.mrb[0].mxu0
        %v909 = vadd.f32 %v691, %v908
        %v910 = vpop.f32.mrb[0].mxu0
        %v911 = vpop.f32.mrb[0].mxu0
        %v912 = vadd.f32 %v691, %v911
        %v913 = vpop.f32.mrb[0].mxu0
        %914 = vmatprep.mubr.bf16.mxu0 0
        %915 = vmatmul.mubr.bf16.gmra.mrb[0].mxu0 %v796
        %v916 = vpop.f32.mrb[0].mxu0
        %v917 = vadd.f32 %v691, %v916
        %v918 = vpop.f32.mrb[0].mxu0
        %v919 = vpop.f32.mrb[0].mxu0
        %v920 = vadd.f32 %v691, %v919
        %v921 = vpop.f32.mrb[0].mxu0
        %922 = vmatprep.mubr.bf16.mxu0 0
        %923 = vmatmul.mubr.bf16.gmra.mrb[0].mxu0 %v799
        %v924 = vpop.f32.mrb[0].mxu0
        %v925 = vadd.f32 %v691, %v924
        %v926 = vpop.f32.mrb[0].mxu0
        %v927 = vpop.f32.mrb[0].mxu0
        %v928 = vadd.f32 %v691, %v927
        %v929 = vpop.f32.mrb[0].mxu0
        %930 = vmatprep.mubr.bf16.mxu0 0
        %931 = vmatmul.mubr.bf16.gmra.mrb[0].mxu0 %v802
        %v932 = vpop.f32.mrb[0].mxu0
        %v933 = vadd.f32 %v691, %v932
        %v934 = vpop.f32.mrb[0].mxu0
        %v935 = vpop.f32.mrb[0].mxu0
        %v936 = vadd.f32 %v691, %v935
        %v937 = vpop.f32.mrb[0].mxu0
        %938 = vmatprep.mubr.bf16.mxu0 0
        %939 = vmatmul.mubr.bf16.gmra.mrb[0].mxu0 %v805
        %v940 = vpop.f32.mrb[0].mxu0
        %v941 = vadd.f32 %v691, %v940
        %v942 = vpop.f32.mrb[0].mxu0
        %v943 = vpop.f32.mrb[0].mxu0
        %v944 = vadd.f32 %v691, %v943
        %v945 = vpop.f32.mrb[0].mxu0
        %946 = vmatprep.mubr.bf16.mxu0 0
        %947 = vmatmul.mubr.bf16.gmra.mrb[0].mxu0 %v808
        %v948 = vpop.f32.mrb[0].mxu0
        %v949 = vadd.f32 %v691, %v948
        %v950 = vpop.f32.mrb[0].mxu0
        %v951 = vpop.f32.mrb[0].mxu0
        %v952 = vadd.f32 %v691, %v951
        %v953 = vpop.f32.mrb[0].mxu0
        %954 = vmatprep.mubr.bf16.mxu0 0
        %955 = vmatmul.mubr.bf16.gmra.mrb[0].mxu0 %v811
        %v956 = vpop.f32.mrb[0].mxu0
        %v957 = vadd.f32 %v691, %v956
        %v958 = vpop.f32.mrb[0].mxu0
        %v959 = vpop.f32.mrb[0].mxu0
        %v960 = vadd.f32 %v691, %v959
        %v961 = vpop.f32.mrb[0].mxu0
        %962 = vmatprep.mubr.bf16.mxu0 0
        %963 = vmatmul.mubr.bf16.gmra.mrb[0].mxu0 %v814
        %v964 = vpop.f32.mrb[0].mxu0
        %v965 = vadd.f32 %v691, %v964
        %v966 = vpop.f32.mrb[0].mxu0
        %v967 = vpop.f32.mrb[0].mxu0
        %v968 = vadd.f32 %v691, %v967
        %v969 = vpop.f32.mrb[0].mxu0
        %970 = vmatprep.mubr.bf16.mxu0 0
        %971 = vmatmul.mubr.bf16.gmra.mrb[0].mxu0 %v817
        %v972 = vpop.f32.mrb[0].mxu0
        %v973 = vadd.f32 %v691, %v972
        %v974 = vpop.f32.mrb[0].mxu0
        %v975 = vpop.f32.mrb[0].mxu0
        %v976 = vadd.f32 %v691, %v975
        %v977 = vpop.f32.mrb[0].mxu0
        %978 = vmatprep.mubr.bf16.mxu0 0
        %979 = vmatmul.mubr.bf16.gmra.mrb[0].mxu0 %v820
        %v980 = vpop.f32.mrb[0].mxu0
        %v981 = vadd.f32 %v691, %v980
        %v982 = vpop.f32.mrb[0].mxu0
        %v983 = vpop.f32.mrb[0].mxu0
        %v984 = vadd.f32 %v691, %v983
        %v985 = vpop.f32.mrb[0].mxu0
        %986 = vdwg.mxu0
        %987 = vst [vmem:[%s355] sm:$0xff] %v861
        %988 = vst [vmem:[%s355 + $0x8] sm:$0xff] %v864
        %989 = vst [vmem:[%s355 + $0x10] sm:$0xff] %v869
        %990 = vst [vmem:[%s355 + $0x18] sm:$0xff] %v872
        %991 = vst [vmem:[%s355 + $0x20] sm:$0xff] %v877
        %992 = vst [vmem:[%s355 + $0x28] sm:$0xff] %v880
        %993 = vst [vmem:[%s355 + $0x30] sm:$0xff] %v885
        %994 = vst [vmem:[%s355 + $0x38] sm:$0xff] %v888
        %995 = vst [vmem:[%s355 + $0x40] sm:$0xff] %v893
        %996 = vst [vmem:[%s355 + $0x48] sm:$0xff] %v896
        %997 = vst [vmem:[%s355 + $0x50] sm:$0xff] %v901
        %998 = vst [vmem:[%s355 + $0x58] sm:$0xff] %v904
        %999 = vst [vmem:[%s355 + $0x60] sm:$0xff] %v909
        %1000 = vst [vmem:[%s355 + $0x68] sm:$0xff] %v912
        %1001 = vst [vmem:[%s355 + $0x70] sm:$0xff] %v917
        %1002 = vst [vmem:[%s355 + $0x78] sm:$0xff] %v920
        %1003 = vst [vmem:[%s355 + $0x80] sm:$0xff] %v925
        %1004 = vst [vmem:[%s355 + $0x88] sm:$0xff] %v928
        %1005 = vst [vmem:[%s355 + $0x90] sm:$0xff] %v933
        %1006 = vst [vmem:[%s355 + $0x98] sm:$0xff] %v936
        %1007 = vst [vmem:[%s355 + $0xa0] sm:$0xff] %v941
        %1008 = vst [vmem:[%s355 + $0xa8] sm:$0xff] %v944
        %1009 = vst [vmem:[%s355 + $0xb0] sm:$0xff] %v949
        %1010 = vst [vmem:[%s355 + $0xb8] sm:$0xff] %v952
        %1011 = vst [vmem:[%s355 + $0xc0] sm:$0xff] %v957
        %1012 = vst [vmem:[%s355 + $0xc8] sm:$0xff] %v960
        %1013 = vst [vmem:[%s355 + $0xd0] sm:$0xff] %v965
        %1014 = vst [vmem:[%s355 + $0xd8] sm:$0xff] %v968
        %1015 = vst [vmem:[%s355 + $0xe0] sm:$0xff] %v973
        %1016 = vst [vmem:[%s355 + $0xe8] sm:$0xff] %v976
        %1017 = vst [vmem:[%s355 + $0xf0] sm:$0xff] %v981
        %1018 = vst [vmem:[%s355 + $0xf8] sm:$0xff] %v984
        %v1019 = vld [vmem:[%s8] sm:$0xff]
        %v1020 = vld [vmem:[%s8 + $0x8] sm:$0xff]
        %v1021 = vmul.f32 %v620, 0.0
        %v1022 = vadd.f32 %v615, %v1021
        %v1024 = vsel %vm401, %v1019, 0
        %v1027 = vsel %vm401, %v1020, 0
        %1029 = vmatprep.subr.mxu0 0.0
        %1030 = vmatpush1.msra.mxu0 %v1022
        %1031 = vmatprep.subr.mxu0 0.0
        %1032 = vmatpush1.msra.mxu0 0.0
        %1033 = vmatprep.subr.mxu0 0.0
        %1034 = vmatpush1.msra.mxu0 0.0
        %1035 = vmatprep.subr.mxu0 0.0
        %1036 = vmatpush1.msra.mxu0 0.0
        %1037 = vmatprep.subr.mxu0 0.0
        %1038 = vmatpush1.msra.mxu0 0.0
        %1039 = vmatprep.subr.mxu0 0.0
        %1040 = vmatpush1.msra.mxu0 0.0
        %1041 = vmatprep.subr.mxu0 0.0
        %1042 = vmatpush1.msra.mxu0 0.0
        %1043 = vmatprep.subr.mxu0 0.0
        %1044 = vmatpush1.msra.mxu0 0.0
        %1045 = vmatprep.subr.mxu0 0.0
        %1046 = vmatpush1.msra.mxu0 0.0
        %1047 = vmatprep.subr.mxu0 0.0
        %1048 = vmatpush1.msra.mxu0 0.0
        %1049 = vmatprep.subr.mxu0 0.0
        %1050 = vmatpush1.msra.mxu0 0.0
        %1051 = vmatprep.subr.mxu0 0.0
        %1052 = vmatpush1.msra.mxu0 0.0
        %1053 = vmatprep.subr.mxu0 0.0
        %1054 = vmatpush1.msra.mxu0 0.0
        %1055 = vmatprep.subr.mxu0 0.0
        %1056 = vmatpush1.msra.mxu0 0.0
        %1057 = vmatprep.subr.mxu0 0.0
        %1058 = vmatpush1.msra.mxu0 0.0
        %1059 = vmatprep.subr.mxu0 0.0
        %1060 = vmatpush1.msra.mxu0 0.0
        %1061 = vmatprep.subr.mxu0 0.0
        %1062 = vmatpush1.msra.mxu0 0.0
        %1063 = vmatprep.subr.mxu0 0.0
        %1064 = vmatpush1.msra.mxu0 0.0
        %1065 = vmatprep.subr.mxu0 0.0
        %1066 = vmatpush1.msra.mxu0 0.0
        %1067 = vmatprep.subr.mxu0 0.0
        %1068 = vmatpush1.msra.mxu0 0.0
        %1069 = vmatprep.subr.mxu0 0.0
        %1070 = vmatpush1.msra.mxu0 0.0
        %1071 = vmatprep.subr.mxu0 0.0
        %1072 = vmatpush1.msra.mxu0 0.0
        %1073 = vmatprep.subr.mxu0 0.0
        %1074 = vmatpush1.msra.mxu0 0.0
        %1075 = vmatprep.subr.mxu0 0.0
        %1076 = vmatpush1.msra.mxu0 0.0
        %1077 = vmatprep.subr.mxu0 0.0
        %1078 = vmatpush1.msra.mxu0 0.0
        %1079 = vmatprep.subr.mxu0 0.0
        %1080 = vmatpush1.msra.mxu0 0.0
        %1081 = vmatprep.subr.mxu0 0.0
        %1082 = vmatpush1.msra.mxu0 0.0
        %1083 = vmatprep.subr.mxu0 0.0
        %1084 = vmatpush1.msra.mxu0 0.0
        %1085 = vmatprep.subr.mxu0 0.0
        %1086 = vmatpush1.msra.mxu0 0.0
        %1087 = vmatprep.subr.mxu0 0.0
        %1088 = vmatpush1.msra.mxu0 0.0
        %1089 = vmatprep.subr.mxu0 0.0
        %1090 = vmatpush1.msra.mxu0 0.0
        %1091 = vmatprep.subr.mxu0 0.0
        %1092 = vmatpush1.msra.mxu0 0.0
        %1093 = vmatprep.mubr.f32.mxu0 0.0
        %1094 = vmatmul.mubr.f32.gmra.mrb[0].mxu0 %v1024
        %v1095 = vpop.f32.mrb[0].mxu0
        %v1096 = vadd.f32 0.0, %v1095
        %v1097 = vpop.f32.mrb[0].mxu0
        %1098 = vmatprep.mubr.f32.mxu0 0.0
        %1099 = vmatmul.mubr.f32.gmra.mrb[0].mxu0 %v1027
        %v1100 = vpop.f32.mrb[0].mxu0
        %v1101 = vadd.f32 0.0, %v1100
        %v1102 = vpop.f32.mrb[0].mxu0
        %1103 = vdwg.mxu0
        %v1104 = vld [vmem:[%s355] sm:$0xff]
        %v1105 = vld [vmem:[%s355 + $0x8] sm:$0xff]
        %v1106 = vadd.f32 %v1104, %v1096
        %v1107 = vadd.f32 %v1105, %v1101
        %1108 = vst [vmem:[%s355] sm:$0xff] %v1106
        %1109 = vst [vmem:[%s355 + $0x8] sm:$0xff] %v1107
        %v1110 = vmul.f32 %v615, 0.75
        %v1111 = vmul.f32 %v620, 0.25
        %v1112 = vadd.f32 %v1110, %v1111
        %1113 = vmatprep.subr.mxu0 0.0
        %1114 = vmatpush1.msra.mxu0 %v1112
        %1115 = vmatprep.subr.mxu0 0.0
        %1116 = vmatpush1.msra.mxu0 0.0
        %1117 = vmatprep.subr.mxu0 0.0
        %1118 = vmatpush1.msra.mxu0 0.0
        %1119 = vmatprep.subr.mxu0 0.0
        %1120 = vmatpush1.msra.mxu0 0.0
        %1121 = vmatprep.subr.mxu0 0.0
        %1122 = vmatpush1.msra.mxu0 0.0
        %1123 = vmatprep.subr.mxu0 0.0
        %1124 = vmatpush1.msra.mxu0 0.0
        %1125 = vmatprep.subr.mxu0 0.0
        %1126 = vmatpush1.msra.mxu0 0.0
        %1127 = vmatprep.subr.mxu0 0.0
        %1128 = vmatpush1.msra.mxu0 0.0
        %1129 = vmatprep.subr.mxu0 0.0
        %1130 = vmatpush1.msra.mxu0 0.0
        %1131 = vmatprep.subr.mxu0 0.0
        %1132 = vmatpush1.msra.mxu0 0.0
        %1133 = vmatprep.subr.mxu0 0.0
        %1134 = vmatpush1.msra.mxu0 0.0
        %1135 = vmatprep.subr.mxu0 0.0
        %1136 = vmatpush1.msra.mxu0 0.0
        %1137 = vmatprep.subr.mxu0 0.0
        %1138 = vmatpush1.msra.mxu0 0.0
        %1139 = vmatprep.subr.mxu0 0.0
        %1140 = vmatpush1.msra.mxu0 0.0
        %1141 = vmatprep.subr.mxu0 0.0
        %1142 = vmatpush1.msra.mxu0 0.0
        %1143 = vmatprep.subr.mxu0 0.0
        %1144 = vmatpush1.msra.mxu0 0.0
        %1145 = vmatprep.subr.mxu0 0.0
        %1146 = vmatpush1.msra.mxu0 0.0
        %1147 = vmatprep.subr.mxu0 0.0
        %1148 = vmatpush1.msra.mxu0 0.0
        %1149 = vmatprep.subr.mxu0 0.0
        %1150 = vmatpush1.msra.mxu0 0.0
        %1151 = vmatprep.subr.mxu0 0.0
        %1152 = vmatpush1.msra.mxu0 0.0
        %1153 = vmatprep.subr.mxu0 0.0
        %1154 = vmatpush1.msra.mxu0 0.0
        %1155 = vmatprep.subr.mxu0 0.0
        %1156 = vmatpush1.msra.mxu0 0.0
        %1157 = vmatprep.subr.mxu0 0.0
        %1158 = vmatpush1.msra.mxu0 0.0
        %1159 = vmatprep.subr.mxu0 0.0
        %1160 = vmatpush1.msra.mxu0 0.0
        %1161 = vmatprep.subr.mxu0 0.0
        %1162 = vmatpush1.msra.mxu0 0.0
        %1163 = vmatprep.subr.mxu0 0.0
        %1164 = vmatpush1.msra.mxu0 0.0
        %1165 = vmatprep.subr.mxu0 0.0
        %1166 = vmatpush1.msra.mxu0 0.0
        %1167 = vmatprep.subr.mxu0 0.0
        %1168 = vmatpush1.msra.mxu0 0.0
        %1169 = vmatprep.subr.mxu0 0.0
        %1170 = vmatpush1.msra.mxu0 0.0
        %1171 = vmatprep.subr.mxu0 0.0
        %1172 = vmatpush1.msra.mxu0 0.0
        %1173 = vmatprep.subr.mxu0 0.0
        %1174 = vmatpush1.msra.mxu0 0.0
        %1175 = vmatprep.subr.mxu0 0.0
        %1176 = vmatpush1.msra.mxu0 0.0
        %1177 = vmatprep.mubr.f32.mxu0 0.0
        %1178 = vmatmul.mubr.f32.gmra.mrb[0].mxu0 %v1024
        %v1179 = vpop.f32.mrb[0].mxu0
        %v1180 = vadd.f32 0.0, %v1179
        %v1181 = vpop.f32.mrb[0].mxu0
        %1182 = vmatprep.mubr.f32.mxu0 0.0
        %1183 = vmatmul.mubr.f32.gmra.mrb[0].mxu0 %v1027
        %v1184 = vpop.f32.mrb[0].mxu0
        %v1185 = vadd.f32 0.0, %v1184
        %v1186 = vpop.f32.mrb[0].mxu0
        %1187 = vdwg.mxu0
        %v1188 = vld [vmem:[%s355 + $0x10] sm:$0xff]
        %v1189 = vld [vmem:[%s355 + $0x18] sm:$0xff]
        %v1190 = vadd.f32 %v1188, %v1180
        %v1191 = vadd.f32 %v1189, %v1185
        %1192 = vst [vmem:[%s355 + $0x10] sm:$0xff] %v1190
        %1193 = vst [vmem:[%s355 + $0x18] sm:$0xff] %v1191
        %v1194 = vmul.f32 %v615, 0.25
        %v1195 = vmul.f32 %v620, 0.75
        %v1196 = vadd.f32 %v1194, %v1195
        %1197 = vmatprep.subr.mxu0 0.0
        %1198 = vmatpush1.msra.mxu0 %v1196
        %1199 = vmatprep.subr.mxu0 0.0
        %1200 = vmatpush1.msra.mxu0 0.0
        %1201 = vmatprep.subr.mxu0 0.0
        %1202 = vmatpush1.msra.mxu0 0.0
        %1203 = vmatprep.subr.mxu0 0.0
        %1204 = vmatpush1.msra.mxu0 0.0
        %1205 = vmatprep.subr.mxu0 0.0
        %1206 = vmatpush1.msra.mxu0 0.0
        %1207 = vmatprep.subr.mxu0 0.0
        %1208 = vmatpush1.msra.mxu0 0.0
        %1209 = vmatprep.subr.mxu0 0.0
        %1210 = vmatpush1.msra.mxu0 0.0
        %1211 = vmatprep.subr.mxu0 0.0
        %1212 = vmatpush1.msra.mxu0 0.0
        %1213 = vmatprep.subr.mxu0 0.0
        %1214 = vmatpush1.msra.mxu0 0.0
        %1215 = vmatprep.subr.mxu0 0.0
        %1216 = vmatpush1.msra.mxu0 0.0
        %1217 = vmatprep.subr.mxu0 0.0
        %1218 = vmatpush1.msra.mxu0 0.0
        %1219 = vmatprep.subr.mxu0 0.0
        %1220 = vmatpush1.msra.mxu0 0.0
        %1221 = vmatprep.subr.mxu0 0.0
        %1222 = vmatpush1.msra.mxu0 0.0
        %1223 = vmatprep.subr.mxu0 0.0
        %1224 = vmatpush1.msra.mxu0 0.0
        %1225 = vmatprep.subr.mxu0 0.0
        %1226 = vmatpush1.msra.mxu0 0.0
        %1227 = vmatprep.subr.mxu0 0.0
        %1228 = vmatpush1.msra.mxu0 0.0
        %1229 = vmatprep.subr.mxu0 0.0
        %1230 = vmatpush1.msra.mxu0 0.0
        %1231 = vmatprep.subr.mxu0 0.0
        %1232 = vmatpush1.msra.mxu0 0.0
        %1233 = vmatprep.subr.mxu0 0.0
        %1234 = vmatpush1.msra.mxu0 0.0
        %1235 = vmatprep.subr.mxu0 0.0
        %1236 = vmatpush1.msra.mxu0 0.0
        %1237 = vmatprep.subr.mxu0 0.0
        %1238 = vmatpush1.msra.mxu0 0.0
        %1239 = vmatprep.subr.mxu0 0.0
        %1240 = vmatpush1.msra.mxu0 0.0
        %1241 = vmatprep.subr.mxu0 0.0
        %1242 = vmatpush1.msra.mxu0 0.0
        %1243 = vmatprep.subr.mxu0 0.0
        %1244 = vmatpush1.msra.mxu0 0.0
        %1245 = vmatprep.subr.mxu0 0.0
        %1246 = vmatpush1.msra.mxu0 0.0
        %1247 = vmatprep.subr.mxu0 0.0
        %1248 = vmatpush1.msra.mxu0 0.0
        %1249 = vmatprep.subr.mxu0 0.0
        %1250 = vmatpush1.msra.mxu0 0.0
        %1251 = vmatprep.subr.mxu0 0.0
        %1252 = vmatpush1.msra.mxu0 0.0
        %1253 = vmatprep.subr.mxu0 0.0
        %1254 = vmatpush1.msra.mxu0 0.0
        %1255 = vmatprep.subr.mxu0 0.0
        %1256 = vmatpush1.msra.mxu0 0.0
        %1257 = vmatprep.subr.mxu0 0.0
        %1258 = vmatpush1.msra.mxu0 0.0
        %1259 = vmatprep.subr.mxu0 0.0
        %1260 = vmatpush1.msra.mxu0 0.0
        %1261 = vmatprep.mubr.f32.mxu0 0.0
        %1262 = vmatmul.mubr.f32.gmra.mrb[0].mxu0 %v1024
        %v1263 = vpop.f32.mrb[0].mxu0
        %v1264 = vadd.f32 0.0, %v1263
        %v1265 = vpop.f32.mrb[0].mxu0
        %1266 = vmatprep.mubr.f32.mxu0 0.0
        %1267 = vmatmul.mubr.f32.gmra.mrb[0].mxu0 %v1027
        %v1268 = vpop.f32.mrb[0].mxu0
        %v1269 = vadd.f32 0.0, %v1268
        %v1270 = vpop.f32.mrb[0].mxu0
        %1271 = vdwg.mxu0
        %v1272 = vld [vmem:[%s355 + $0x20] sm:$0xff]
        %v1273 = vld [vmem:[%s355 + $0x28] sm:$0xff]
        %v1274 = vadd.f32 %v1272, %v1264
        %v1275 = vadd.f32 %v1273, %v1269
        %1276 = vst [vmem:[%s355 + $0x20] sm:$0xff] %v1274
        %1277 = vst [vmem:[%s355 + $0x28] sm:$0xff] %v1275
        %v1278 = vmul.f32 %v625, 0.25
        %v1279 = vadd.f32 %v1195, %v1278
        %1280 = vmatprep.subr.mxu0 0.0
        %1281 = vmatpush1.msra.mxu0 %v1279
        %1282 = vmatprep.subr.mxu0 0.0
        %1283 = vmatpush1.msra.mxu0 0.0
        %1284 = vmatprep.subr.mxu0 0.0
        %1285 = vmatpush1.msra.mxu0 0.0
        %1286 = vmatprep.subr.mxu0 0.0
        %1287 = vmatpush1.msra.mxu0 0.0
        %1288 = vmatprep.subr.mxu0 0.0
        %1289 = vmatpush1.msra.mxu0 0.0
        %1290 = vmatprep.subr.mxu0 0.0
        %1291 = vmatpush1.msra.mxu0 0.0
        %1292 = vmatprep.subr.mxu0 0.0
        %1293 = vmatpush1.msra.mxu0 0.0
        %1294 = vmatprep.subr.mxu0 0.0
        %1295 = vmatpush1.msra.mxu0 0.0
        %1296 = vmatprep.subr.mxu0 0.0
        %1297 = vmatpush1.msra.mxu0 0.0
        %1298 = vmatprep.subr.mxu0 0.0
        %1299 = vmatpush1.msra.mxu0 0.0
        %1300 = vmatprep.subr.mxu0 0.0
        %1301 = vmatpush1.msra.mxu0 0.0
        %1302 = vmatprep.subr.mxu0 0.0
        %1303 = vmatpush1.msra.mxu0 0.0
        %1304 = vmatprep.subr.mxu0 0.0
        %1305 = vmatpush1.msra.mxu0 0.0
        %1306 = vmatprep.subr.mxu0 0.0
        %1307 = vmatpush1.msra.mxu0 0.0
        %1308 = vmatprep.subr.mxu0 0.0
        %1309 = vmatpush1.msra.mxu0 0.0
        %1310 = vmatprep.subr.mxu0 0.0
        %1311 = vmatpush1.msra.mxu0 0.0
        %1312 = vmatprep.subr.mxu0 0.0
        %1313 = vmatpush1.msra.mxu0 0.0
        %1314 = vmatprep.subr.mxu0 0.0
        %1315 = vmatpush1.msra.mxu0 0.0
        %1316 = vmatprep.subr.mxu0 0.0
        %1317 = vmatpush1.msra.mxu0 0.0
        %1318 = vmatprep.subr.mxu0 0.0
        %1319 = vmatpush1.msra.mxu0 0.0
        %1320 = vmatprep.subr.mxu0 0.0
        %1321 = vmatpush1.msra.mxu0 0.0
        %1322 = vmatprep.subr.mxu0 0.0
        %1323 = vmatpush1.msra.mxu0 0.0
        %1324 = vmatprep.subr.mxu0 0.0
        %1325 = vmatpush1.msra.mxu0 0.0
        %1326 = vmatprep.subr.mxu0 0.0
        %1327 = vmatpush1.msra.mxu0 0.0
        %1328 = vmatprep.subr.mxu0 0.0
        %1329 = vmatpush1.msra.mxu0 0.0
        %1330 = vmatprep.subr.mxu0 0.0
        %1331 = vmatpush1.msra.mxu0 0.0
        %1332 = vmatprep.subr.mxu0 0.0
        %1333 = vmatpush1.msra.mxu0 0.0
        %1334 = vmatprep.subr.mxu0 0.0
        %1335 = vmatpush1.msra.mxu0 0.0
        %1336 = vmatprep.subr.mxu0 0.0
        %1337 = vmatpush1.msra.mxu0 0.0
        %1338 = vmatprep.subr.mxu0 0.0
        %1339 = vmatpush1.msra.mxu0 0.0
        %1340 = vmatprep.subr.mxu0 0.0
        %1341 = vmatpush1.msra.mxu0 0.0
        %1342 = vmatprep.subr.mxu0 0.0
        %1343 = vmatpush1.msra.mxu0 0.0
        %1344 = vmatprep.mubr.f32.mxu0 0.0
        %1345 = vmatmul.mubr.f32.gmra.mrb[0].mxu0 %v1024
        %v1346 = vpop.f32.mrb[0].mxu0
        %v1347 = vadd.f32 0.0, %v1346
        %v1348 = vpop.f32.mrb[0].mxu0
        %1349 = vmatprep.mubr.f32.mxu0 0.0
        %1350 = vmatmul.mubr.f32.gmra.mrb[0].mxu0 %v1027
        %v1351 = vpop.f32.mrb[0].mxu0
        %v1352 = vadd.f32 0.0, %v1351
        %v1353 = vpop.f32.mrb[0].mxu0
        %1354 = vdwg.mxu0
        %v1355 = vld [vmem:[%s355 + $0x30] sm:$0xff]
        %v1356 = vld [vmem:[%s355 + $0x38] sm:$0xff]
        %v1357 = vadd.f32 %v1355, %v1347
        %v1358 = vadd.f32 %v1356, %v1352
        %1359 = vst [vmem:[%s355 + $0x30] sm:$0xff] %v1357
        %1360 = vst [vmem:[%s355 + $0x38] sm:$0xff] %v1358
        %v1361 = vmul.f32 %v625, 0.75
        %v1362 = vadd.f32 %v1111, %v1361
        %1363 = vmatprep.subr.mxu0 0.0
        %1364 = vmatpush1.msra.mxu0 %v1362
        %1365 = vmatprep.subr.mxu0 0.0
        %1366 = vmatpush1.msra.mxu0 0.0
        %1367 = vmatprep.subr.mxu0 0.0
        %1368 = vmatpush1.msra.mxu0 0.0
        %1369 = vmatprep.subr.mxu0 0.0
        %1370 = vmatpush1.msra.mxu0 0.0
        %1371 = vmatprep.subr.mxu0 0.0
        %1372 = vmatpush1.msra.mxu0 0.0
        %1373 = vmatprep.subr.mxu0 0.0
        %1374 = vmatpush1.msra.mxu0 0.0
        %1375 = vmatprep.subr.mxu0 0.0
        %1376 = vmatpush1.msra.mxu0 0.0
        %1377 = vmatprep.subr.mxu0 0.0
        %1378 = vmatpush1.msra.mxu0 0.0
        %1379 = vmatprep.subr.mxu0 0.0
        %1380 = vmatpush1.msra.mxu0 0.0
        %1381 = vmatprep.subr.mxu0 0.0
        %1382 = vmatpush1.msra.mxu0 0.0
        %1383 = vmatprep.subr.mxu0 0.0
        %1384 = vmatpush1.msra.mxu0 0.0
        %1385 = vmatprep.subr.mxu0 0.0
        %1386 = vmatpush1.msra.mxu0 0.0
        %1387 = vmatprep.subr.mxu0 0.0
        %1388 = vmatpush1.msra.mxu0 0.0
        %1389 = vmatprep.subr.mxu0 0.0
        %1390 = vmatpush1.msra.mxu0 0.0
        %1391 = vmatprep.subr.mxu0 0.0
        %1392 = vmatpush1.msra.mxu0 0.0
        %1393 = vmatprep.subr.mxu0 0.0
        %1394 = vmatpush1.msra.mxu0 0.0
        %1395 = vmatprep.subr.mxu0 0.0
        %1396 = vmatpush1.msra.mxu0 0.0
        %1397 = vmatprep.subr.mxu0 0.0
        %1398 = vmatpush1.msra.mxu0 0.0
        %1399 = vmatprep.subr.mxu0 0.0
        %1400 = vmatpush1.msra.mxu0 0.0
        %1401 = vmatprep.subr.mxu0 0.0
        %1402 = vmatpush1.msra.mxu0 0.0
        %1403 = vmatprep.subr.mxu0 0.0
        %1404 = vmatpush1.msra.mxu0 0.0
        %1405 = vmatprep.subr.mxu0 0.0
        %1406 = vmatpush1.msra.mxu0 0.0
        %1407 = vmatprep.subr.mxu0 0.0
        %1408 = vmatpush1.msra.mxu0 0.0
        %1409 = vmatprep.subr.mxu0 0.0
        %1410 = vmatpush1.msra.mxu0 0.0
        %1411 = vmatprep.subr.mxu0 0.0
        %1412 = vmatpush1.msra.mxu0 0.0
        %1413 = vmatprep.subr.mxu0 0.0
        %1414 = vmatpush1.msra.mxu0 0.0
        %1415 = vmatprep.subr.mxu0 0.0
        %1416 = vmatpush1.msra.mxu0 0.0
        %1417 = vmatprep.subr.mxu0 0.0
        %1418 = vmatpush1.msra.mxu0 0.0
        %1419 = vmatprep.subr.mxu0 0.0
        %1420 = vmatpush1.msra.mxu0 0.0
        %1421 = vmatprep.subr.mxu0 0.0
        %1422 = vmatpush1.msra.mxu0 0.0
        %1423 = vmatprep.subr.mxu0 0.0
        %1424 = vmatpush1.msra.mxu0 0.0
        %1425 = vmatprep.subr.mxu0 0.0
        %1426 = vmatpush1.msra.mxu0 0.0
        %1427 = vmatprep.mubr.f32.mxu0 0.0
        %1428 = vmatmul.mubr.f32.gmra.mrb[0].mxu0 %v1024
        %v1429 = vpop.f32.mrb[0].mxu0
        %v1430 = vadd.f32 0.0, %v1429
        %v1431 = vpop.f32.mrb[0].mxu0
        %1432 = vmatprep.mubr.f32.mxu0 0.0
        %1433 = vmatmul.mubr.f32.gmra.mrb[0].mxu0 %v1027
        %v1434 = vpop.f32.mrb[0].mxu0
        %v1435 = vadd.f32 0.0, %v1434
        %v1436 = vpop.f32.mrb[0].mxu0
        %1437 = vdwg.mxu0
        %v1438 = vld [vmem:[%s355 + $0x40] sm:$0xff]
        %v1439 = vld [vmem:[%s355 + $0x48] sm:$0xff]
        %v1440 = vadd.f32 %v1438, %v1430
        %v1441 = vadd.f32 %v1439, %v1435
        %1442 = vst [vmem:[%s355 + $0x40] sm:$0xff] %v1440
        %1443 = vst [vmem:[%s355 + $0x48] sm:$0xff] %v1441
        %v1444 = vmul.f32 %v630, 0.25
        %v1445 = vadd.f32 %v1361, %v1444
        %1446 = vmatprep.subr.mxu0 0.0
        %1447 = vmatpush1.msra.mxu0 %v1445
        %1448 = vmatprep.subr.mxu0 0.0
        %1449 = vmatpush1.msra.mxu0 0.0
        %1450 = vmatprep.subr.mxu0 0.0
        %1451 = vmatpush1.msra.mxu0 0.0
        %1452 = vmatprep.subr.mxu0 0.0
        %1453 = vmatpush1.msra.mxu0 0.0
        %1454 = vmatprep.subr.mxu0 0.0
        %1455 = vmatpush1.msra.mxu0 0.0
        %1456 = vmatprep.subr.mxu0 0.0
        %1457 = vmatpush1.msra.mxu0 0.0
        %1458 = vmatprep.subr.mxu0 0.0
        %1459 = vmatpush1.msra.mxu0 0.0
        %1460 = vmatprep.subr.mxu0 0.0
        %1461 = vmatpush1.msra.mxu0 0.0
        %1462 = vmatprep.subr.mxu0 0.0
        %1463 = vmatpush1.msra.mxu0 0.0
        %1464 = vmatprep.subr.mxu0 0.0
        %1465 = vmatpush1.msra.mxu0 0.0
        %1466 = vmatprep.subr.mxu0 0.0
        %1467 = vmatpush1.msra.mxu0 0.0
        %1468 = vmatprep.subr.mxu0 0.0
        %1469 = vmatpush1.msra.mxu0 0.0
        %1470 = vmatprep.subr.mxu0 0.0
        %1471 = vmatpush1.msra.mxu0 0.0
        %1472 = vmatprep.subr.mxu0 0.0
        %1473 = vmatpush1.msra.mxu0 0.0
        %1474 = vmatprep.subr.mxu0 0.0
        %1475 = vmatpush1.msra.mxu0 0.0
        %1476 = vmatprep.subr.mxu0 0.0
        %1477 = vmatpush1.msra.mxu0 0.0
        %1478 = vmatprep.subr.mxu0 0.0
        %1479 = vmatpush1.msra.mxu0 0.0
        %1480 = vmatprep.subr.mxu0 0.0
        %1481 = vmatpush1.msra.mxu0 0.0
        %1482 = vmatprep.subr.mxu0 0.0
        %1483 = vmatpush1.msra.mxu0 0.0
        %1484 = vmatprep.subr.mxu0 0.0
        %1485 = vmatpush1.msra.mxu0 0.0
        %1486 = vmatprep.subr.mxu0 0.0
        %1487 = vmatpush1.msra.mxu0 0.0
        %1488 = vmatprep.subr.mxu0 0.0
        %1489 = vmatpush1.msra.mxu0 0.0
        %1490 = vmatprep.subr.mxu0 0.0
        %1491 = vmatpush1.msra.mxu0 0.0
        %1492 = vmatprep.subr.mxu0 0.0
        %1493 = vmatpush1.msra.mxu0 0.0
        %1494 = vmatprep.subr.mxu0 0.0
        %1495 = vmatpush1.msra.mxu0 0.0
        %1496 = vmatprep.subr.mxu0 0.0
        %1497 = vmatpush1.msra.mxu0 0.0
        %1498 = vmatprep.subr.mxu0 0.0
        %1499 = vmatpush1.msra.mxu0 0.0
        %1500 = vmatprep.subr.mxu0 0.0
        %1501 = vmatpush1.msra.mxu0 0.0
        %1502 = vmatprep.subr.mxu0 0.0
        %1503 = vmatpush1.msra.mxu0 0.0
        %1504 = vmatprep.subr.mxu0 0.0
        %1505 = vmatpush1.msra.mxu0 0.0
        %1506 = vmatprep.subr.mxu0 0.0
        %1507 = vmatpush1.msra.mxu0 0.0
        %1508 = vmatprep.subr.mxu0 0.0
        %1509 = vmatpush1.msra.mxu0 0.0
        %1510 = vmatprep.mubr.f32.mxu0 0.0
        %1511 = vmatmul.mubr.f32.gmra.mrb[0].mxu0 %v1024
        %v1512 = vpop.f32.mrb[0].mxu0
        %v1513 = vadd.f32 0.0, %v1512
        %v1514 = vpop.f32.mrb[0].mxu0
        %1515 = vmatprep.mubr.f32.mxu0 0.0
        %1516 = vmatmul.mubr.f32.gmra.mrb[0].mxu0 %v1027
        %v1517 = vpop.f32.mrb[0].mxu0
        %v1518 = vadd.f32 0.0, %v1517
        %v1519 = vpop.f32.mrb[0].mxu0
        %1520 = vdwg.mxu0
        %v1521 = vld [vmem:[%s355 + $0x50] sm:$0xff]
        %v1522 = vld [vmem:[%s355 + $0x58] sm:$0xff]
        %v1523 = vadd.f32 %v1521, %v1513
        %v1524 = vadd.f32 %v1522, %v1518
        %1525 = vst [vmem:[%s355 + $0x50] sm:$0xff] %v1523
        %1526 = vst [vmem:[%s355 + $0x58] sm:$0xff] %v1524
        %v1527 = vmul.f32 %v630, 0.75
        %v1528 = vadd.f32 %v1278, %v1527
        %1529 = vmatprep.subr.mxu0 0.0
        %1530 = vmatpush1.msra.mxu0 %v1528
        %1531 = vmatprep.subr.mxu0 0.0
        %1532 = vmatpush1.msra.mxu0 0.0
        %1533 = vmatprep.subr.mxu0 0.0
        %1534 = vmatpush1.msra.mxu0 0.0
        %1535 = vmatprep.subr.mxu0 0.0
        %1536 = vmatpush1.msra.mxu0 0.0
        %1537 = vmatprep.subr.mxu0 0.0
        %1538 = vmatpush1.msra.mxu0 0.0
        %1539 = vmatprep.subr.mxu0 0.0
        %1540 = vmatpush1.msra.mxu0 0.0
        %1541 = vmatprep.subr.mxu0 0.0
        %1542 = vmatpush1.msra.mxu0 0.0
        %1543 = vmatprep.subr.mxu0 0.0
        %1544 = vmatpush1.msra.mxu0 0.0
        %1545 = vmatprep.subr.mxu0 0.0
        %1546 = vmatpush1.msra.mxu0 0.0
        %1547 = vmatprep.subr.mxu0 0.0
        %1548 = vmatpush1.msra.mxu0 0.0
        %1549 = vmatprep.subr.mxu0 0.0
        %1550 = vmatpush1.msra.mxu0 0.0
        %1551 = vmatprep.subr.mxu0 0.0
        %1552 = vmatpush1.msra.mxu0 0.0
        %1553 = vmatprep.subr.mxu0 0.0
        %1554 = vmatpush1.msra.mxu0 0.0
        %1555 = vmatprep.subr.mxu0 0.0
        %1556 = vmatpush1.msra.mxu0 0.0
        %1557 = vmatprep.subr.mxu0 0.0
        %1558 = vmatpush1.msra.mxu0 0.0
        %1559 = vmatprep.subr.mxu0 0.0
        %1560 = vmatpush1.msra.mxu0 0.0
        %1561 = vmatprep.subr.mxu0 0.0
        %1562 = vmatpush1.msra.mxu0 0.0
        %1563 = vmatprep.subr.mxu0 0.0
        %1564 = vmatpush1.msra.mxu0 0.0
        %1565 = vmatprep.subr.mxu0 0.0
        %1566 = vmatpush1.msra.mxu0 0.0
        %1567 = vmatprep.subr.mxu0 0.0
        %1568 = vmatpush1.msra.mxu0 0.0
        %1569 = vmatprep.subr.mxu0 0.0
        %1570 = vmatpush1.msra.mxu0 0.0
        %1571 = vmatprep.subr.mxu0 0.0
        %1572 = vmatpush1.msra.mxu0 0.0
        %1573 = vmatprep.subr.mxu0 0.0
        %1574 = vmatpush1.msra.mxu0 0.0
        %1575 = vmatprep.subr.mxu0 0.0
        %1576 = vmatpush1.msra.mxu0 0.0
        %1577 = vmatprep.subr.mxu0 0.0
        %1578 = vmatpush1.msra.mxu0 0.0
        %1579 = vmatprep.subr.mxu0 0.0
        %1580 = vmatpush1.msra.mxu0 0.0
        %1581 = vmatprep.subr.mxu0 0.0
        %1582 = vmatpush1.msra.mxu0 0.0
        %1583 = vmatprep.subr.mxu0 0.0
        %1584 = vmatpush1.msra.mxu0 0.0
        %1585 = vmatprep.subr.mxu0 0.0
        %1586 = vmatpush1.msra.mxu0 0.0
        %1587 = vmatprep.subr.mxu0 0.0
        %1588 = vmatpush1.msra.mxu0 0.0
        %1589 = vmatprep.subr.mxu0 0.0
        %1590 = vmatpush1.msra.mxu0 0.0
        %1591 = vmatprep.subr.mxu0 0.0
        %1592 = vmatpush1.msra.mxu0 0.0
        %1593 = vmatprep.mubr.f32.mxu0 0.0
        %1594 = vmatmul.mubr.f32.gmra.mrb[0].mxu0 %v1024
        %v1595 = vpop.f32.mrb[0].mxu0
        %v1596 = vadd.f32 0.0, %v1595
        %v1597 = vpop.f32.mrb[0].mxu0
        %1598 = vmatprep.mubr.f32.mxu0 0.0
        %1599 = vmatmul.mubr.f32.gmra.mrb[0].mxu0 %v1027
        %v1600 = vpop.f32.mrb[0].mxu0
        %v1601 = vadd.f32 0.0, %v1600
        %v1602 = vpop.f32.mrb[0].mxu0
        %1603 = vdwg.mxu0
        %v1604 = vld [vmem:[%s355 + $0x60] sm:$0xff]
        %v1605 = vld [vmem:[%s355 + $0x68] sm:$0xff]
        %v1606 = vadd.f32 %v1604, %v1596
        %v1607 = vadd.f32 %v1605, %v1601
        %1608 = vst [vmem:[%s355 + $0x60] sm:$0xff] %v1606
        %1609 = vst [vmem:[%s355 + $0x68] sm:$0xff] %v1607
        %v1610 = vmul.f32 %v635, 0.25
        %v1611 = vadd.f32 %v1527, %v1610
        %1612 = vmatprep.subr.mxu0 0.0
        %1613 = vmatpush1.msra.mxu0 %v1611
        %1614 = vmatprep.subr.mxu0 0.0
        %1615 = vmatpush1.msra.mxu0 0.0
        %1616 = vmatprep.subr.mxu0 0.0
        %1617 = vmatpush1.msra.mxu0 0.0
        %1618 = vmatprep.subr.mxu0 0.0
        %1619 = vmatpush1.msra.mxu0 0.0
        %1620 = vmatprep.subr.mxu0 0.0
        %1621 = vmatpush1.msra.mxu0 0.0
        %1622 = vmatprep.subr.mxu0 0.0
        %1623 = vmatpush1.msra.mxu0 0.0
        %1624 = vmatprep.subr.mxu0 0.0
        %1625 = vmatpush1.msra.mxu0 0.0
        %1626 = vmatprep.subr.mxu0 0.0
        %1627 = vmatpush1.msra.mxu0 0.0
        %1628 = vmatprep.subr.mxu0 0.0
        %1629 = vmatpush1.msra.mxu0 0.0
        %1630 = vmatprep.subr.mxu0 0.0
        %1631 = vmatpush1.msra.mxu0 0.0
        %1632 = vmatprep.subr.mxu0 0.0
        %1633 = vmatpush1.msra.mxu0 0.0
        %1634 = vmatprep.subr.mxu0 0.0
        %1635 = vmatpush1.msra.mxu0 0.0
        %1636 = vmatprep.subr.mxu0 0.0
        %1637 = vmatpush1.msra.mxu0 0.0
        %1638 = vmatprep.subr.mxu0 0.0
        %1639 = vmatpush1.msra.mxu0 0.0
        %1640 = vmatprep.subr.mxu0 0.0
        %1641 = vmatpush1.msra.mxu0 0.0
        %1642 = vmatprep.subr.mxu0 0.0
        %1643 = vmatpush1.msra.mxu0 0.0
        %1644 = vmatprep.subr.mxu0 0.0
        %1645 = vmatpush1.msra.mxu0 0.0
        %1646 = vmatprep.subr.mxu0 0.0
        %1647 = vmatpush1.msra.mxu0 0.0
        %1648 = vmatprep.subr.mxu0 0.0
        %1649 = vmatpush1.msra.mxu0 0.0
        %1650 = vmatprep.subr.mxu0 0.0
        %1651 = vmatpush1.msra.mxu0 0.0
        %1652 = vmatprep.subr.mxu0 0.0
        %1653 = vmatpush1.msra.mxu0 0.0
        %1654 = vmatprep.subr.mxu0 0.0
        %1655 = vmatpush1.msra.mxu0 0.0
        %1656 = vmatprep.subr.mxu0 0.0
        %1657 = vmatpush1.msra.mxu0 0.0
        %1658 = vmatprep.subr.mxu0 0.0
        %1659 = vmatpush1.msra.mxu0 0.0
        %1660 = vmatprep.subr.mxu0 0.0
        %1661 = vmatpush1.msra.mxu0 0.0
        %1662 = vmatprep.subr.mxu0 0.0
        %1663 = vmatpush1.msra.mxu0 0.0
        %1664 = vmatprep.subr.mxu0 0.0
        %1665 = vmatpush1.msra.mxu0 0.0
        %1666 = vmatprep.subr.mxu0 0.0
        %1667 = vmatpush1.msra.mxu0 0.0
        %1668 = vmatprep.subr.mxu0 0.0
        %1669 = vmatpush1.msra.mxu0 0.0
        %1670 = vmatprep.subr.mxu0 0.0
        %1671 = vmatpush1.msra.mxu0 0.0
        %1672 = vmatprep.subr.mxu0 0.0
        %1673 = vmatpush1.msra.mxu0 0.0
        %1674 = vmatprep.subr.mxu0 0.0
        %1675 = vmatpush1.msra.mxu0 0.0
        %1676 = vmatprep.mubr.f32.mxu0 0.0
        %1677 = vmatmul.mubr.f32.gmra.mrb[0].mxu0 %v1024
        %v1678 = vpop.f32.mrb[0].mxu0
        %v1679 = vadd.f32 0.0, %v1678
        %v1680 = vpop.f32.mrb[0].mxu0
        %1681 = vmatprep.mubr.f32.mxu0 0.0
        %1682 = vmatmul.mubr.f32.gmra.mrb[0].mxu0 %v1027
        %v1683 = vpop.f32.mrb[0].mxu0
        %v1684 = vadd.f32 0.0, %v1683
        %v1685 = vpop.f32.mrb[0].mxu0
        %1686 = vdwg.mxu0
        %v1687 = vld [vmem:[%s355 + $0x70] sm:$0xff]
        %v1688 = vld [vmem:[%s355 + $0x78] sm:$0xff]
        %v1689 = vadd.f32 %v1687, %v1679
        %v1690 = vadd.f32 %v1688, %v1684
        %1691 = vst [vmem:[%s355 + $0x70] sm:$0xff] %v1689
        %1692 = vst [vmem:[%s355 + $0x78] sm:$0xff] %v1690
        %v1693 = vmul.f32 %v635, 0.75
        %v1694 = vadd.f32 %v1444, %v1693
        %1695 = vmatprep.subr.mxu0 0.0
        %1696 = vmatpush1.msra.mxu0 %v1694
        %1697 = vmatprep.subr.mxu0 0.0
        %1698 = vmatpush1.msra.mxu0 0.0
        %1699 = vmatprep.subr.mxu0 0.0
        %1700 = vmatpush1.msra.mxu0 0.0
        %1701 = vmatprep.subr.mxu0 0.0
        %1702 = vmatpush1.msra.mxu0 0.0
        %1703 = vmatprep.subr.mxu0 0.0
        %1704 = vmatpush1.msra.mxu0 0.0
        %1705 = vmatprep.subr.mxu0 0.0
        %1706 = vmatpush1.msra.mxu0 0.0
        %1707 = vmatprep.subr.mxu0 0.0
        %1708 = vmatpush1.msra.mxu0 0.0
        %1709 = vmatprep.subr.mxu0 0.0
        %1710 = vmatpush1.msra.mxu0 0.0
        %1711 = vmatprep.subr.mxu0 0.0
        %1712 = vmatpush1.msra.mxu0 0.0
        %1713 = vmatprep.subr.mxu0 0.0
        %1714 = vmatpush1.msra.mxu0 0.0
        %1715 = vmatprep.subr.mxu0 0.0
        %1716 = vmatpush1.msra.mxu0 0.0
        %1717 = vmatprep.subr.mxu0 0.0
        %1718 = vmatpush1.msra.mxu0 0.0
        %1719 = vmatprep.subr.mxu0 0.0
        %1720 = vmatpush1.msra.mxu0 0.0
        %1721 = vmatprep.subr.mxu0 0.0
        %1722 = vmatpush1.msra.mxu0 0.0
        %1723 = vmatprep.subr.mxu0 0.0
        %1724 = vmatpush1.msra.mxu0 0.0
        %1725 = vmatprep.subr.mxu0 0.0
        %1726 = vmatpush1.msra.mxu0 0.0
        %1727 = vmatprep.subr.mxu0 0.0
        %1728 = vmatpush1.msra.mxu0 0.0
        %1729 = vmatprep.subr.mxu0 0.0
        %1730 = vmatpush1.msra.mxu0 0.0
        %1731 = vmatprep.subr.mxu0 0.0
        %1732 = vmatpush1.msra.mxu0 0.0
        %1733 = vmatprep.subr.mxu0 0.0
        %1734 = vmatpush1.msra.mxu0 0.0
        %1735 = vmatprep.subr.mxu0 0.0
        %1736 = vmatpush1.msra.mxu0 0.0
        %1737 = vmatprep.subr.mxu0 0.0
        %1738 = vmatpush1.msra.mxu0 0.0
        %1739 = vmatprep.subr.mxu0 0.0
        %1740 = vmatpush1.msra.mxu0 0.0
        %1741 = vmatprep.subr.mxu0 0.0
        %1742 = vmatpush1.msra.mxu0 0.0
        %1743 = vmatprep.subr.mxu0 0.0
        %1744 = vmatpush1.msra.mxu0 0.0
        %1745 = vmatprep.subr.mxu0 0.0
        %1746 = vmatpush1.msra.mxu0 0.0
        %1747 = vmatprep.subr.mxu0 0.0
        %1748 = vmatpush1.msra.mxu0 0.0
        %1749 = vmatprep.subr.mxu0 0.0
        %1750 = vmatpush1.msra.mxu0 0.0
        %1751 = vmatprep.subr.mxu0 0.0
        %1752 = vmatpush1.msra.mxu0 0.0
        %1753 = vmatprep.subr.mxu0 0.0
        %1754 = vmatpush1.msra.mxu0 0.0
        %1755 = vmatprep.subr.mxu0 0.0
        %1756 = vmatpush1.msra.mxu0 0.0
        %1757 = vmatprep.subr.mxu0 0.0
        %1758 = vmatpush1.msra.mxu0 0.0
        %1759 = vmatprep.mubr.f32.mxu0 0.0
        %1760 = vmatmul.mubr.f32.gmra.mrb[0].mxu0 %v1024
        %v1761 = vpop.f32.mrb[0].mxu0
        %v1762 = vadd.f32 0.0, %v1761
        %v1763 = vpop.f32.mrb[0].mxu0
        %1764 = vmatprep.mubr.f32.mxu0 0.0
        %1765 = vmatmul.mubr.f32.gmra.mrb[0].mxu0 %v1027
        %v1766 = vpop.f32.mrb[0].mxu0
        %v1767 = vadd.f32 0.0, %v1766
        %v1768 = vpop.f32.mrb[0].mxu0
        %1769 = vdwg.mxu0
        %v1770 = vld [vmem:[%s355 + $0x80] sm:$0xff]
        %v1771 = vld [vmem:[%s355 + $0x88] sm:$0xff]
        %v1772 = vadd.f32 %v1770, %v1762
        %v1773 = vadd.f32 %v1771, %v1767
        %1774 = vst [vmem:[%s355 + $0x80] sm:$0xff] %v1772
        %1775 = vst [vmem:[%s355 + $0x88] sm:$0xff] %v1773
        %v1776 = vmul.f32 %v640, 0.25
        %v1777 = vadd.f32 %v1693, %v1776
        %1778 = vmatprep.subr.mxu0 0.0
        %1779 = vmatpush1.msra.mxu0 %v1777
        %1780 = vmatprep.subr.mxu0 0.0
        %1781 = vmatpush1.msra.mxu0 0.0
        %1782 = vmatprep.subr.mxu0 0.0
        %1783 = vmatpush1.msra.mxu0 0.0
        %1784 = vmatprep.subr.mxu0 0.0
        %1785 = vmatpush1.msra.mxu0 0.0
        %1786 = vmatprep.subr.mxu0 0.0
        %1787 = vmatpush1.msra.mxu0 0.0
        %1788 = vmatprep.subr.mxu0 0.0
        %1789 = vmatpush1.msra.mxu0 0.0
        %1790 = vmatprep.subr.mxu0 0.0
        %1791 = vmatpush1.msra.mxu0 0.0
        %1792 = vmatprep.subr.mxu0 0.0
        %1793 = vmatpush1.msra.mxu0 0.0
        %1794 = vmatprep.subr.mxu0 0.0
        %1795 = vmatpush1.msra.mxu0 0.0
        %1796 = vmatprep.subr.mxu0 0.0
        %1797 = vmatpush1.msra.mxu0 0.0
        %1798 = vmatprep.subr.mxu0 0.0
        %1799 = vmatpush1.msra.mxu0 0.0
        %1800 = vmatprep.subr.mxu0 0.0
        %1801 = vmatpush1.msra.mxu0 0.0
        %1802 = vmatprep.subr.mxu0 0.0
        %1803 = vmatpush1.msra.mxu0 0.0
        %1804 = vmatprep.subr.mxu0 0.0
        %1805 = vmatpush1.msra.mxu0 0.0
        %1806 = vmatprep.subr.mxu0 0.0
        %1807 = vmatpush1.msra.mxu0 0.0
        %1808 = vmatprep.subr.mxu0 0.0
        %1809 = vmatpush1.msra.mxu0 0.0
        %1810 = vmatprep.subr.mxu0 0.0
        %1811 = vmatpush1.msra.mxu0 0.0
        %1812 = vmatprep.subr.mxu0 0.0
        %1813 = vmatpush1.msra.mxu0 0.0
        %1814 = vmatprep.subr.mxu0 0.0
        %1815 = vmatpush1.msra.mxu0 0.0
        %1816 = vmatprep.subr.mxu0 0.0
        %1817 = vmatpush1.msra.mxu0 0.0
        %1818 = vmatprep.subr.mxu0 0.0
        %1819 = vmatpush1.msra.mxu0 0.0
        %1820 = vmatprep.subr.mxu0 0.0
        %1821 = vmatpush1.msra.mxu0 0.0
        %1822 = vmatprep.subr.mxu0 0.0
        %1823 = vmatpush1.msra.mxu0 0.0
        %1824 = vmatprep.subr.mxu0 0.0
        %1825 = vmatpush1.msra.mxu0 0.0
        %1826 = vmatprep.subr.mxu0 0.0
        %1827 = vmatpush1.msra.mxu0 0.0
        %1828 = vmatprep.subr.mxu0 0.0
        %1829 = vmatpush1.msra.mxu0 0.0
        %1830 = vmatprep.subr.mxu0 0.0
        %1831 = vmatpush1.msra.mxu0 0.0
        %1832 = vmatprep.subr.mxu0 0.0
        %1833 = vmatpush1.msra.mxu0 0.0
        %1834 = vmatprep.subr.mxu0 0.0
        %1835 = vmatpush1.msra.mxu0 0.0
        %1836 = vmatprep.subr.mxu0 0.0
        %1837 = vmatpush1.msra.mxu0 0.0
        %1838 = vmatprep.subr.mxu0 0.0
        %1839 = vmatpush1.msra.mxu0 0.0
        %1840 = vmatprep.subr.mxu0 0.0
        %1841 = vmatpush1.msra.mxu0 0.0
        %1842 = vmatprep.mubr.f32.mxu0 0.0
        %1843 = vmatmul.mubr.f32.gmra.mrb[0].mxu0 %v1024
        %v1844 = vpop.f32.mrb[0].mxu0
        %v1845 = vadd.f32 0.0, %v1844
        %v1846 = vpop.f32.mrb[0].mxu0
        %1847 = vmatprep.mubr.f32.mxu0 0.0
        %1848 = vmatmul.mubr.f32.gmra.mrb[0].mxu0 %v1027
        %v1849 = vpop.f32.mrb[0].mxu0
        %v1850 = vadd.f32 0.0, %v1849
        %v1851 = vpop.f32.mrb[0].mxu0
        %1852 = vdwg.mxu0
        %v1853 = vld [vmem:[%s355 + $0x90] sm:$0xff]
        %v1854 = vld [vmem:[%s355 + $0x98] sm:$0xff]
        %v1855 = vadd.f32 %v1853, %v1845
        %v1856 = vadd.f32 %v1854, %v1850
        %1857 = vst [vmem:[%s355 + $0x90] sm:$0xff] %v1855
        %1858 = vst [vmem:[%s355 + $0x98] sm:$0xff] %v1856
        %v1859 = vmul.f32 %v640, 0.75
        %v1860 = vadd.f32 %v1610, %v1859
        %1861 = vmatprep.subr.mxu0 0.0
        %1862 = vmatpush1.msra.mxu0 %v1860
        %1863 = vmatprep.subr.mxu0 0.0
        %1864 = vmatpush1.msra.mxu0 0.0
        %1865 = vmatprep.subr.mxu0 0.0
        %1866 = vmatpush1.msra.mxu0 0.0
        %1867 = vmatprep.subr.mxu0 0.0
        %1868 = vmatpush1.msra.mxu0 0.0
        %1869 = vmatprep.subr.mxu0 0.0
        %1870 = vmatpush1.msra.mxu0 0.0
        %1871 = vmatprep.subr.mxu0 0.0
        %1872 = vmatpush1.msra.mxu0 0.0
        %1873 = vmatprep.subr.mxu0 0.0
        %1874 = vmatpush1.msra.mxu0 0.0
        %1875 = vmatprep.subr.mxu0 0.0
        %1876 = vmatpush1.msra.mxu0 0.0
        %1877 = vmatprep.subr.mxu0 0.0
        %1878 = vmatpush1.msra.mxu0 0.0
        %1879 = vmatprep.subr.mxu0 0.0
        %1880 = vmatpush1.msra.mxu0 0.0
        %1881 = vmatprep.subr.mxu0 0.0
        %1882 = vmatpush1.msra.mxu0 0.0
        %1883 = vmatprep.subr.mxu0 0.0
        %1884 = vmatpush1.msra.mxu0 0.0
        %1885 = vmatprep.subr.mxu0 0.0
        %1886 = vmatpush1.msra.mxu0 0.0
        %1887 = vmatprep.subr.mxu0 0.0
        %1888 = vmatpush1.msra.mxu0 0.0
        %1889 = vmatprep.subr.mxu0 0.0
        %1890 = vmatpush1.msra.mxu0 0.0
        %1891 = vmatprep.subr.mxu0 0.0
        %1892 = vmatpush1.msra.mxu0 0.0
        %1893 = vmatprep.subr.mxu0 0.0
        %1894 = vmatpush1.msra.mxu0 0.0
        %1895 = vmatprep.subr.mxu0 0.0
        %1896 = vmatpush1.msra.mxu0 0.0
        %1897 = vmatprep.subr.mxu0 0.0
        %1898 = vmatpush1.msra.mxu0 0.0
        %1899 = vmatprep.subr.mxu0 0.0
        %1900 = vmatpush1.msra.mxu0 0.0
        %1901 = vmatprep.subr.mxu0 0.0
        %1902 = vmatpush1.msra.mxu0 0.0
        %1903 = vmatprep.subr.mxu0 0.0
        %1904 = vmatpush1.msra.mxu0 0.0
        %1905 = vmatprep.subr.mxu0 0.0
        %1906 = vmatpush1.msra.mxu0 0.0
        %1907 = vmatprep.subr.mxu0 0.0
        %1908 = vmatpush1.msra.mxu0 0.0
        %1909 = vmatprep.subr.mxu0 0.0
        %1910 = vmatpush1.msra.mxu0 0.0
        %1911 = vmatprep.subr.mxu0 0.0
        %1912 = vmatpush1.msra.mxu0 0.0
        %1913 = vmatprep.subr.mxu0 0.0
        %1914 = vmatpush1.msra.mxu0 0.0
        %1915 = vmatprep.subr.mxu0 0.0
        %1916 = vmatpush1.msra.mxu0 0.0
        %1917 = vmatprep.subr.mxu0 0.0
        %1918 = vmatpush1.msra.mxu0 0.0
        %1919 = vmatprep.subr.mxu0 0.0
        %1920 = vmatpush1.msra.mxu0 0.0
        %1921 = vmatprep.subr.mxu0 0.0
        %1922 = vmatpush1.msra.mxu0 0.0
        %1923 = vmatprep.subr.mxu0 0.0
        %1924 = vmatpush1.msra.mxu0 0.0
        %1925 = vmatprep.mubr.f32.mxu0 0.0
        %1926 = vmatmul.mubr.f32.gmra.mrb[0].mxu0 %v1024
        %v1927 = vpop.f32.mrb[0].mxu0
        %v1928 = vadd.f32 0.0, %v1927
        %v1929 = vpop.f32.mrb[0].mxu0
        %1930 = vmatprep.mubr.f32.mxu0 0.0
        %1931 = vmatmul.mubr.f32.gmra.mrb[0].mxu0 %v1027
        %v1932 = vpop.f32.mrb[0].mxu0
        %v1933 = vadd.f32 0.0, %v1932
        %v1934 = vpop.f32.mrb[0].mxu0
        %1935 = vdwg.mxu0
        %v1936 = vld [vmem:[%s355 + $0xa0] sm:$0xff]
        %v1937 = vld [vmem:[%s355 + $0xa8] sm:$0xff]
        %v1938 = vadd.f32 %v1936, %v1928
        %v1939 = vadd.f32 %v1937, %v1933
        %1940 = vst [vmem:[%s355 + $0xa0] sm:$0xff] %v1938
        %1941 = vst [vmem:[%s355 + $0xa8] sm:$0xff] %v1939
        %v1942 = vmul.f32 %v645, 0.25
        %v1943 = vadd.f32 %v1859, %v1942
        %1944 = vmatprep.subr.mxu0 0.0
        %1945 = vmatpush1.msra.mxu0 %v1943
        %1946 = vmatprep.subr.mxu0 0.0
        %1947 = vmatpush1.msra.mxu0 0.0
        %1948 = vmatprep.subr.mxu0 0.0
        %1949 = vmatpush1.msra.mxu0 0.0
        %1950 = vmatprep.subr.mxu0 0.0
        %1951 = vmatpush1.msra.mxu0 0.0
        %1952 = vmatprep.subr.mxu0 0.0
        %1953 = vmatpush1.msra.mxu0 0.0
        %1954 = vmatprep.subr.mxu0 0.0
        %1955 = vmatpush1.msra.mxu0 0.0
        %1956 = vmatprep.subr.mxu0 0.0
        %1957 = vmatpush1.msra.mxu0 0.0
        %1958 = vmatprep.subr.mxu0 0.0
        %1959 = vmatpush1.msra.mxu0 0.0
        %1960 = vmatprep.subr.mxu0 0.0
        %1961 = vmatpush1.msra.mxu0 0.0
        %1962 = vmatprep.subr.mxu0 0.0
        %1963 = vmatpush1.msra.mxu0 0.0
        %1964 = vmatprep.subr.mxu0 0.0
        %1965 = vmatpush1.msra.mxu0 0.0
        %1966 = vmatprep.subr.mxu0 0.0
        %1967 = vmatpush1.msra.mxu0 0.0
        %1968 = vmatprep.subr.mxu0 0.0
        %1969 = vmatpush1.msra.mxu0 0.0
        %1970 = vmatprep.subr.mxu0 0.0
        %1971 = vmatpush1.msra.mxu0 0.0
        %1972 = vmatprep.subr.mxu0 0.0
        %1973 = vmatpush1.msra.mxu0 0.0
        %1974 = vmatprep.subr.mxu0 0.0
        %1975 = vmatpush1.msra.mxu0 0.0
        %1976 = vmatprep.subr.mxu0 0.0
        %1977 = vmatpush1.msra.mxu0 0.0
        %1978 = vmatprep.subr.mxu0 0.0
        %1979 = vmatpush1.msra.mxu0 0.0
        %1980 = vmatprep.subr.mxu0 0.0
        %1981 = vmatpush1.msra.mxu0 0.0
        %1982 = vmatprep.subr.mxu0 0.0
        %1983 = vmatpush1.msra.mxu0 0.0
        %1984 = vmatprep.subr.mxu0 0.0
        %1985 = vmatpush1.msra.mxu0 0.0
        %1986 = vmatprep.subr.mxu0 0.0
        %1987 = vmatpush1.msra.mxu0 0.0
        %1988 = vmatprep.subr.mxu0 0.0
        %1989 = vmatpush1.msra.mxu0 0.0
        %1990 = vmatprep.subr.mxu0 0.0
        %1991 = vmatpush1.msra.mxu0 0.0
        %1992 = vmatprep.subr.mxu0 0.0
        %1993 = vmatpush1.msra.mxu0 0.0
        %1994 = vmatprep.subr.mxu0 0.0
        %1995 = vmatpush1.msra.mxu0 0.0
        %1996 = vmatprep.subr.mxu0 0.0
        %1997 = vmatpush1.msra.mxu0 0.0
        %1998 = vmatprep.subr.mxu0 0.0
        %1999 = vmatpush1.msra.mxu0 0.0
        %2000 = vmatprep.subr.mxu0 0.0
        %2001 = vmatpush1.msra.mxu0 0.0
        %2002 = vmatprep.subr.mxu0 0.0
        %2003 = vmatpush1.msra.mxu0 0.0
        %2004 = vmatprep.subr.mxu0 0.0
        %2005 = vmatpush1.msra.mxu0 0.0
        %2006 = vmatprep.subr.mxu0 0.0
        %2007 = vmatpush1.msra.mxu0 0.0
        %2008 = vmatprep.mubr.f32.mxu0 0.0
        %2009 = vmatmul.mubr.f32.gmra.mrb[0].mxu0 %v1024
        %v2010 = vpop.f32.mrb[0].mxu0
        %v2011 = vadd.f32 0.0, %v2010
        %v2012 = vpop.f32.mrb[0].mxu0
        %2013 = vmatprep.mubr.f32.mxu0 0.0
        %2014 = vmatmul.mubr.f32.gmra.mrb[0].mxu0 %v1027
        %v2015 = vpop.f32.mrb[0].mxu0
        %v2016 = vadd.f32 0.0, %v2015
        %v2017 = vpop.f32.mrb[0].mxu0
        %2018 = vdwg.mxu0
        %v2019 = vld [vmem:[%s355 + $0xb0] sm:$0xff]
        %v2020 = vld [vmem:[%s355 + $0xb8] sm:$0xff]
        %v2021 = vadd.f32 %v2019, %v2011
        %v2022 = vadd.f32 %v2020, %v2016
        %2023 = vst [vmem:[%s355 + $0xb0] sm:$0xff] %v2021
        %2024 = vst [vmem:[%s355 + $0xb8] sm:$0xff] %v2022
        %v2025 = vmul.f32 %v645, 0.75
        %v2026 = vadd.f32 %v1776, %v2025
        %2027 = vmatprep.subr.mxu0 0.0
        %2028 = vmatpush1.msra.mxu0 %v2026
        %2029 = vmatprep.subr.mxu0 0.0
        %2030 = vmatpush1.msra.mxu0 0.0
        %2031 = vmatprep.subr.mxu0 0.0
        %2032 = vmatpush1.msra.mxu0 0.0
        %2033 = vmatprep.subr.mxu0 0.0
        %2034 = vmatpush1.msra.mxu0 0.0
        %2035 = vmatprep.subr.mxu0 0.0
        %2036 = vmatpush1.msra.mxu0 0.0
        %2037 = vmatprep.subr.mxu0 0.0
        %2038 = vmatpush1.msra.mxu0 0.0
        %2039 = vmatprep.subr.mxu0 0.0
        %2040 = vmatpush1.msra.mxu0 0.0
        %2041 = vmatprep.subr.mxu0 0.0
        %2042 = vmatpush1.msra.mxu0 0.0
        %2043 = vmatprep.subr.mxu0 0.0
        %2044 = vmatpush1.msra.mxu0 0.0
        %2045 = vmatprep.subr.mxu0 0.0
        %2046 = vmatpush1.msra.mxu0 0.0
        %2047 = vmatprep.subr.mxu0 0.0
        %2048 = vmatpush1.msra.mxu0 0.0
        %2049 = vmatprep.subr.mxu0 0.0
        %2050 = vmatpush1.msra.mxu0 0.0
        %2051 = vmatprep.subr.mxu0 0.0
        %2052 = vmatpush1.msra.mxu0 0.0
        %2053 = vmatprep.subr.mxu0 0.0
        %2054 = vmatpush1.msra.mxu0 0.0
        %2055 = vmatprep.subr.mxu0 0.0
        %2056 = vmatpush1.msra.mxu0 0.0
        %2057 = vmatprep.subr.mxu0 0.0
        %2058 = vmatpush1.msra.mxu0 0.0
        %2059 = vmatprep.subr.mxu0 0.0
        %2060 = vmatpush1.msra.mxu0 0.0
        %2061 = vmatprep.subr.mxu0 0.0
        %2062 = vmatpush1.msra.mxu0 0.0
        %2063 = vmatprep.subr.mxu0 0.0
        %2064 = vmatpush1.msra.mxu0 0.0
        %2065 = vmatprep.subr.mxu0 0.0
        %2066 = vmatpush1.msra.mxu0 0.0
        %2067 = vmatprep.subr.mxu0 0.0
        %2068 = vmatpush1.msra.mxu0 0.0
        %2069 = vmatprep.subr.mxu0 0.0
        %2070 = vmatpush1.msra.mxu0 0.0
        %2071 = vmatprep.subr.mxu0 0.0
        %2072 = vmatpush1.msra.mxu0 0.0
        %2073 = vmatprep.subr.mxu0 0.0
        %2074 = vmatpush1.msra.mxu0 0.0
        %2075 = vmatprep.subr.mxu0 0.0
        %2076 = vmatpush1.msra.mxu0 0.0
        %2077 = vmatprep.subr.mxu0 0.0
        %2078 = vmatpush1.msra.mxu0 0.0
        %2079 = vmatprep.subr.mxu0 0.0
        %2080 = vmatpush1.msra.mxu0 0.0
        %2081 = vmatprep.subr.mxu0 0.0
        %2082 = vmatpush1.msra.mxu0 0.0
        %2083 = vmatprep.subr.mxu0 0.0
        %2084 = vmatpush1.msra.mxu0 0.0
        %2085 = vmatprep.subr.mxu0 0.0
        %2086 = vmatpush1.msra.mxu0 0.0
        %2087 = vmatprep.subr.mxu0 0.0
        %2088 = vmatpush1.msra.mxu0 0.0
        %2089 = vmatprep.subr.mxu0 0.0
        %2090 = vmatpush1.msra.mxu0 0.0
        %2091 = vmatprep.mubr.f32.mxu0 0.0
        %2092 = vmatmul.mubr.f32.gmra.mrb[0].mxu0 %v1024
        %v2093 = vpop.f32.mrb[0].mxu0
        %v2094 = vadd.f32 0.0, %v2093
        %v2095 = vpop.f32.mrb[0].mxu0
        %2096 = vmatprep.mubr.f32.mxu0 0.0
        %2097 = vmatmul.mubr.f32.gmra.mrb[0].mxu0 %v1027
        %v2098 = vpop.f32.mrb[0].mxu0
        %v2099 = vadd.f32 0.0, %v2098
        %v2100 = vpop.f32.mrb[0].mxu0
        %2101 = vdwg.mxu0
        %v2102 = vld [vmem:[%s355 + $0xc0] sm:$0xff]
        %v2103 = vld [vmem:[%s355 + $0xc8] sm:$0xff]
        %v2104 = vadd.f32 %v2102, %v2094
        %v2105 = vadd.f32 %v2103, %v2099
        %2106 = vst [vmem:[%s355 + $0xc0] sm:$0xff] %v2104
        %2107 = vst [vmem:[%s355 + $0xc8] sm:$0xff] %v2105
        %v2108 = vmul.f32 %v650, 0.25
        %v2109 = vadd.f32 %v2025, %v2108
        %2110 = vmatprep.subr.mxu0 0.0
        %2111 = vmatpush1.msra.mxu0 %v2109
        %2112 = vmatprep.subr.mxu0 0.0
        %2113 = vmatpush1.msra.mxu0 0.0
        %2114 = vmatprep.subr.mxu0 0.0
        %2115 = vmatpush1.msra.mxu0 0.0
        %2116 = vmatprep.subr.mxu0 0.0
        %2117 = vmatpush1.msra.mxu0 0.0
        %2118 = vmatprep.subr.mxu0 0.0
        %2119 = vmatpush1.msra.mxu0 0.0
        %2120 = vmatprep.subr.mxu0 0.0
        %2121 = vmatpush1.msra.mxu0 0.0
        %2122 = vmatprep.subr.mxu0 0.0
        %2123 = vmatpush1.msra.mxu0 0.0
        %2124 = vmatprep.subr.mxu0 0.0
        %2125 = vmatpush1.msra.mxu0 0.0
        %2126 = vmatprep.subr.mxu0 0.0
        %2127 = vmatpush1.msra.mxu0 0.0
        %2128 = vmatprep.subr.mxu0 0.0
        %2129 = vmatpush1.msra.mxu0 0.0
        %2130 = vmatprep.subr.mxu0 0.0
        %2131 = vmatpush1.msra.mxu0 0.0
        %2132 = vmatprep.subr.mxu0 0.0
        %2133 = vmatpush1.msra.mxu0 0.0
        %2134 = vmatprep.subr.mxu0 0.0
        %2135 = vmatpush1.msra.mxu0 0.0
        %2136 = vmatprep.subr.mxu0 0.0
        %2137 = vmatpush1.msra.mxu0 0.0
        %2138 = vmatprep.subr.mxu0 0.0
        %2139 = vmatpush1.msra.mxu0 0.0
        %2140 = vmatprep.subr.mxu0 0.0
        %2141 = vmatpush1.msra.mxu0 0.0
        %2142 = vmatprep.subr.mxu0 0.0
        %2143 = vmatpush1.msra.mxu0 0.0
        %2144 = vmatprep.subr.mxu0 0.0
        %2145 = vmatpush1.msra.mxu0 0.0
        %2146 = vmatprep.subr.mxu0 0.0
        %2147 = vmatpush1.msra.mxu0 0.0
        %2148 = vmatprep.subr.mxu0 0.0
        %2149 = vmatpush1.msra.mxu0 0.0
        %2150 = vmatprep.subr.mxu0 0.0
        %2151 = vmatpush1.msra.mxu0 0.0
        %2152 = vmatprep.subr.mxu0 0.0
        %2153 = vmatpush1.msra.mxu0 0.0
        %2154 = vmatprep.subr.mxu0 0.0
        %2155 = vmatpush1.msra.mxu0 0.0
        %2156 = vmatprep.subr.mxu0 0.0
        %2157 = vmatpush1.msra.mxu0 0.0
        %2158 = vmatprep.subr.mxu0 0.0
        %2159 = vmatpush1.msra.mxu0 0.0
        %2160 = vmatprep.subr.mxu0 0.0
        %2161 = vmatpush1.msra.mxu0 0.0
        %2162 = vmatprep.subr.mxu0 0.0
        %2163 = vmatpush1.msra.mxu0 0.0
        %2164 = vmatprep.subr.mxu0 0.0
        %2165 = vmatpush1.msra.mxu0 0.0
        %2166 = vmatprep.subr.mxu0 0.0
        %2167 = vmatpush1.msra.mxu0 0.0
        %2168 = vmatprep.subr.mxu0 0.0
        %2169 = vmatpush1.msra.mxu0 0.0
        %2170 = vmatprep.subr.mxu0 0.0
        %2171 = vmatpush1.msra.mxu0 0.0
        %2172 = vmatprep.subr.mxu0 0.0
        %2173 = vmatpush1.msra.mxu0 0.0
        %2174 = vmatprep.mubr.f32.mxu0 0.0
        %2175 = vmatmul.mubr.f32.gmra.mrb[0].mxu0 %v1024
        %v2176 = vpop.f32.mrb[0].mxu0
        %v2177 = vadd.f32 0.0, %v2176
        %v2178 = vpop.f32.mrb[0].mxu0
        %2179 = vmatprep.mubr.f32.mxu0 0.0
        %2180 = vmatmul.mubr.f32.gmra.mrb[0].mxu0 %v1027
        %v2181 = vpop.f32.mrb[0].mxu0
        %v2182 = vadd.f32 0.0, %v2181
        %v2183 = vpop.f32.mrb[0].mxu0
        %2184 = vdwg.mxu0
        %v2185 = vld [vmem:[%s355 + $0xd0] sm:$0xff]
        %v2186 = vld [vmem:[%s355 + $0xd8] sm:$0xff]
        %v2187 = vadd.f32 %v2185, %v2177
        %v2188 = vadd.f32 %v2186, %v2182
        %2189 = vst [vmem:[%s355 + $0xd0] sm:$0xff] %v2187
        %2190 = vst [vmem:[%s355 + $0xd8] sm:$0xff] %v2188
        %v2191 = vmul.f32 %v650, 0.75
        %v2192 = vadd.f32 %v1942, %v2191
        %2193 = vmatprep.subr.mxu0 0.0
        %2194 = vmatpush1.msra.mxu0 %v2192
        %2195 = vmatprep.subr.mxu0 0.0
        %2196 = vmatpush1.msra.mxu0 0.0
        %2197 = vmatprep.subr.mxu0 0.0
        %2198 = vmatpush1.msra.mxu0 0.0
        %2199 = vmatprep.subr.mxu0 0.0
        %2200 = vmatpush1.msra.mxu0 0.0
        %2201 = vmatprep.subr.mxu0 0.0
        %2202 = vmatpush1.msra.mxu0 0.0
        %2203 = vmatprep.subr.mxu0 0.0
        %2204 = vmatpush1.msra.mxu0 0.0
        %2205 = vmatprep.subr.mxu0 0.0
        %2206 = vmatpush1.msra.mxu0 0.0
        %2207 = vmatprep.subr.mxu0 0.0
        %2208 = vmatpush1.msra.mxu0 0.0
        %2209 = vmatprep.subr.mxu0 0.0
        %2210 = vmatpush1.msra.mxu0 0.0
        %2211 = vmatprep.subr.mxu0 0.0
        %2212 = vmatpush1.msra.mxu0 0.0
        %2213 = vmatprep.subr.mxu0 0.0
        %2214 = vmatpush1.msra.mxu0 0.0
        %2215 = vmatprep.subr.mxu0 0.0
        %2216 = vmatpush1.msra.mxu0 0.0
        %2217 = vmatprep.subr.mxu0 0.0
        %2218 = vmatpush1.msra.mxu0 0.0
        %2219 = vmatprep.subr.mxu0 0.0
        %2220 = vmatpush1.msra.mxu0 0.0
        %2221 = vmatprep.subr.mxu0 0.0
        %2222 = vmatpush1.msra.mxu0 0.0
        %2223 = vmatprep.subr.mxu0 0.0
        %2224 = vmatpush1.msra.mxu0 0.0
        %2225 = vmatprep.subr.mxu0 0.0
        %2226 = vmatpush1.msra.mxu0 0.0
        %2227 = vmatprep.subr.mxu0 0.0
        %2228 = vmatpush1.msra.mxu0 0.0
        %2229 = vmatprep.subr.mxu0 0.0
        %2230 = vmatpush1.msra.mxu0 0.0
        %2231 = vmatprep.subr.mxu0 0.0
        %2232 = vmatpush1.msra.mxu0 0.0
        %2233 = vmatprep.subr.mxu0 0.0
        %2234 = vmatpush1.msra.mxu0 0.0
        %2235 = vmatprep.subr.mxu0 0.0
        %2236 = vmatpush1.msra.mxu0 0.0
        %2237 = vmatprep.subr.mxu0 0.0
        %2238 = vmatpush1.msra.mxu0 0.0
        %2239 = vmatprep.subr.mxu0 0.0
        %2240 = vmatpush1.msra.mxu0 0.0
        %2241 = vmatprep.subr.mxu0 0.0
        %2242 = vmatpush1.msra.mxu0 0.0
        %2243 = vmatprep.subr.mxu0 0.0
        %2244 = vmatpush1.msra.mxu0 0.0
        %2245 = vmatprep.subr.mxu0 0.0
        %2246 = vmatpush1.msra.mxu0 0.0
        %2247 = vmatprep.subr.mxu0 0.0
        %2248 = vmatpush1.msra.mxu0 0.0
        %2249 = vmatprep.subr.mxu0 0.0
        %2250 = vmatpush1.msra.mxu0 0.0
        %2251 = vmatprep.subr.mxu0 0.0
        %2252 = vmatpush1.msra.mxu0 0.0
        %2253 = vmatprep.subr.mxu0 0.0
        %2254 = vmatpush1.msra.mxu0 0.0
        %2255 = vmatprep.subr.mxu0 0.0
        %2256 = vmatpush1.msra.mxu0 0.0
        %2257 = vmatprep.mubr.f32.mxu0 0.0
        %2258 = vmatmul.mubr.f32.gmra.mrb[0].mxu0 %v1024
        %v2259 = vpop.f32.mrb[0].mxu0
        %v2260 = vadd.f32 0.0, %v2259
        %v2261 = vpop.f32.mrb[0].mxu0
        %2262 = vmatprep.mubr.f32.mxu0 0.0
        %2263 = vmatmul.mubr.f32.gmra.mrb[0].mxu0 %v1027
        %v2264 = vpop.f32.mrb[0].mxu0
        %v2265 = vadd.f32 0.0, %v2264
        %v2266 = vpop.f32.mrb[0].mxu0
        %2267 = vdwg.mxu0
        %v2268 = vld [vmem:[%s355 + $0xe0] sm:$0xff]
        %v2269 = vld [vmem:[%s355 + $0xe8] sm:$0xff]
        %v2270 = vadd.f32 %v2268, %v2260
        %v2271 = vadd.f32 %v2269, %v2265
        %2272 = vst [vmem:[%s355 + $0xe0] sm:$0xff] %v2270
        %2273 = vst [vmem:[%s355 + $0xe8] sm:$0xff] %v2271
        %v2274 = vadd.f32 %v2191, %v2108
        %2275 = vmatprep.subr.mxu0 0.0
        %2276 = vmatpush1.msra.mxu0 %v2274
        %2277 = vmatprep.subr.mxu0 0.0
        %2278 = vmatpush1.msra.mxu0 0.0
        %2279 = vmatprep.subr.mxu0 0.0
        %2280 = vmatpush1.msra.mxu0 0.0
        %2281 = vmatprep.subr.mxu0 0.0
        %2282 = vmatpush1.msra.mxu0 0.0
        %2283 = vmatprep.subr.mxu0 0.0
        %2284 = vmatpush1.msra.mxu0 0.0
        %2285 = vmatprep.subr.mxu0 0.0
        %2286 = vmatpush1.msra.mxu0 0.0
        %2287 = vmatprep.subr.mxu0 0.0
        %2288 = vmatpush1.msra.mxu0 0.0
        %2289 = vmatprep.subr.mxu0 0.0
        %2290 = vmatpush1.msra.mxu0 0.0
        %2291 = vmatprep.subr.mxu0 0.0
        %2292 = vmatpush1.msra.mxu0 0.0
        %2293 = vmatprep.subr.mxu0 0.0
        %2294 = vmatpush1.msra.mxu0 0.0
        %2295 = vmatprep.subr.mxu0 0.0
        %2296 = vmatpush1.msra.mxu0 0.0
        %2297 = vmatprep.subr.mxu0 0.0
        %2298 = vmatpush1.msra.mxu0 0.0
        %2299 = vmatprep.subr.mxu0 0.0
        %2300 = vmatpush1.msra.mxu0 0.0
        %2301 = vmatprep.subr.mxu0 0.0
        %2302 = vmatpush1.msra.mxu0 0.0
        %2303 = vmatprep.subr.mxu0 0.0
        %2304 = vmatpush1.msra.mxu0 0.0
        %2305 = vmatprep.subr.mxu0 0.0
        %2306 = vmatpush1.msra.mxu0 0.0
        %2307 = vmatprep.subr.mxu0 0.0
        %2308 = vmatpush1.msra.mxu0 0.0
        %2309 = vmatprep.subr.mxu0 0.0
        %2310 = vmatpush1.msra.mxu0 0.0
        %2311 = vmatprep.subr.mxu0 0.0
        %2312 = vmatpush1.msra.mxu0 0.0
        %2313 = vmatprep.subr.mxu0 0.0
        %2314 = vmatpush1.msra.mxu0 0.0
        %2315 = vmatprep.subr.mxu0 0.0
        %2316 = vmatpush1.msra.mxu0 0.0
        %2317 = vmatprep.subr.mxu0 0.0
        %2318 = vmatpush1.msra.mxu0 0.0
        %2319 = vmatprep.subr.mxu0 0.0
        %2320 = vmatpush1.msra.mxu0 0.0
        %2321 = vmatprep.subr.mxu0 0.0
        %2322 = vmatpush1.msra.mxu0 0.0
        %2323 = vmatprep.subr.mxu0 0.0
        %2324 = vmatpush1.msra.mxu0 0.0
        %2325 = vmatprep.subr.mxu0 0.0
        %2326 = vmatpush1.msra.mxu0 0.0
        %2327 = vmatprep.subr.mxu0 0.0
        %2328 = vmatpush1.msra.mxu0 0.0
        %2329 = vmatprep.subr.mxu0 0.0
        %2330 = vmatpush1.msra.mxu0 0.0
        %2331 = vmatprep.subr.mxu0 0.0
        %2332 = vmatpush1.msra.mxu0 0.0
        %2333 = vmatprep.subr.mxu0 0.0
        %2334 = vmatpush1.msra.mxu0 0.0
        %2335 = vmatprep.subr.mxu0 0.0
        %2336 = vmatpush1.msra.mxu0 0.0
        %2337 = vmatprep.subr.mxu0 0.0
        %2338 = vmatpush1.msra.mxu0 0.0
        %2339 = vmatprep.mubr.f32.mxu0 0.0
        %2340 = vmatmul.mubr.f32.gmra.mrb[0].mxu0 %v1024
        %v2341 = vpop.f32.mrb[0].mxu0
        %v2342 = vadd.f32 0.0, %v2341
        %v2343 = vpop.f32.mrb[0].mxu0
        %2344 = vmatprep.mubr.f32.mxu0 0.0
        %2345 = vmatmul.mubr.f32.gmra.mrb[0].mxu0 %v1027
        %v2346 = vpop.f32.mrb[0].mxu0
        %v2347 = vadd.f32 0.0, %v2346
        %v2348 = vpop.f32.mrb[0].mxu0
        %2349 = vdwg.mxu0
        %v2350 = vld [vmem:[%s355 + $0xf0] sm:$0xff]
        %v2351 = vld [vmem:[%s355 + $0xf8] sm:$0xff]
        %v2352 = vadd.f32 %v2350, %v2342
        %v2353 = vadd.f32 %v2351, %v2347
        %2354 = vst [vmem:[%s355 + $0xf0] sm:$0xff] %v2352
        %2355 = vst [vmem:[%s355 + $0xf8] sm:$0xff] %v2353
        %s2356 = sand.u32 %s235, 1
        %s2357 = scalar_lea.sflag [#allocation3], %s2356
        %s2358 = sand.u32 %s235, 1
        %s2359 = smul.addr %s2358, 256
        %s2360 = scalar_lea.vmem [#allocation2], %s2359
        // Predicated region
        $region57: #{tpu_custom_call.1} parent=55 // pred_check
          %p2361 = pneg %p245
        $region58: #{tpu_custom_call.1} parent=55 // pred_check_branch
          %2363 = sbr.rel (%p2361) target = $region60
        $region59: #{tpu_custom_call.1} parent=55 // pred_region
          %s2365 = ssub.s32 4096, 4096
          %2366 = vsyncadd %s2357, %s2365
          %s2367 = smul.addr %s23, 32
          %s2368 = smul.addr %s2367, 128
          %s2369 = scalar_lea.hbm %s9, %s2368
          %s2370 = sshll.u32 %s2360, 4
          %s2371 = int_to_ptr.vmem [resolvable:$true] %s2370
          %2376 = dma.vmem_to_hbm [thread:$0]  %s2371, 4096, %s2369, %s2357, 128, 128, 8
        $region60: #{tpu_custom_call.1} parent=55 // pred_fallthru
          _
      $region56: #{tpu_custom_call.1} parent=5 // pred_fallthru
        _
      %p2377 = scmp.le.s32.totalorder 2, %s18
      // Predicated region
      $region61: #{tpu_custom_call.1} parent=5 // pred_check
        %p2378 = pneg %p2377
      $region62: #{tpu_custom_call.1} parent=5 // pred_check_branch
        %2380 = sbr.rel (%p2378) target = $region64
      $region63: #{tpu_custom_call.1} parent=5 // pred_region
        %s2381 = ssub.s32 %s18, 2
        // Predicated region
        $region65: #{tpu_custom_call.1} parent=63 // pred_check
          %p2382 = pneg %p251
        $region66: #{tpu_custom_call.1} parent=63 // pred_check_branch
          %2384 = sbr.rel (%p2382) target = $region68
        $region67: #{tpu_custom_call.1} parent=63 // pred_region
          %s2385 = sand.u32 %s236, 1
          %s2386 = scalar_lea.sflag [#allocation3], %s2385
          %s2387 = sand.u32 %s236, 1
          %s2388 = smul.addr %s2387, 256
          %s2389 = scalar_lea.vmem [#allocation2], %s2388
          %2390 = dma.done %s2386, 4096
        $region68: #{tpu_custom_call.1} parent=63 // pred_fallthru
          _
      $region64: #{tpu_custom_call.1} parent=5 // pred_fallthru
        _
    $region6: #{tpu_custom_call.1} parent=1 // loop_footer
      %s22 = sadd.s32 1, %s18
    $region7: #{tpu_custom_call.1} parent=1 // loop_footer_branch
      %17 = sbr.rel target = $region3
    $region8: #{tpu_custom_call.1} parent=1 // loop_exit
      _
    %2391 = vsyncpa [#allocation3], 1
    %s2392 = scalar_lea.sflag [#allocation3], 1
    %2393 = vsyncpa %s2392, 1

</llo_original>
